<compile_context>
chip_gen: v7x
topology: tpu7x:2x2x1
jax: 0.10.0
libtpu: 0.0.40
codegen_flags: <defaults>
</compile_context>

<pallas_src>
import functools

import jax
import jax.numpy as jnp
from jax import lax
from jax.experimental import pallas as pl
from jax.experimental.pallas import tpu as pltpu

_LANE = 128
_SUBLANE = 8


def _round_up(x, m):
    return ((x + m - 1) // m) * m


def _vmem_limit_bytes(dim, c, cout_pad, t_pad, num_layers):
    f32 = 4
    # Double-buffered HBM<->VMEM blocks (x in, logits out).
    blocks = 2 * dim * t_pad * f32 + 2 * cout_pad * t_pad * f32
    # Resident weights (biases counted with their lane-padded (C,1) slabs).
    weights = 2 * f32 * (c * dim + c * _LANE
                         + num_layers * c * 5 * c + num_layers * c * _LANE
                         + cout_pad * c + cout_pad * _LANE)
    # Scratches (f + stacked taps) + in-kernel temporaries (shift/select temps,
    # f32 accumulator, residual).
    scratch = (c + 5 * c) * t_pad * f32
    temps = 8 * c * t_pad * f32
    need = blocks + weights + scratch + temps
    return int(min(48 << 20, max(32 << 20, 2 * need)))


# ------------------------- fused full-stack kernel ---------------------------

def _make_fused_kernel(num_layers, t_valid):
    dilations = [(2 ** (num_layers - 1 - i), 2 ** i) for i in range(num_layers)]

    def kernel(x_ref, w_in_ref, b_in_ref, wl_ref, bl_ref, w_out_ref, b_out_ref,
               o_ref, f_sc, stk_sc):
        c, t_pad = f_sc.shape
        col = lax.broadcasted_iota(jnp.int32, (c, t_pad), 1)

        def shifted(f, d):
            # d > 0: out[t] = f[t-d]    (zero for t < d, like the conv's left
            #                            zero-padding).
            # d < 0: out[t] = f[t+|d|]  (zero once t+|d| reaches the true
            #                            sequence length; this both reproduces
            #                            the right zero-padding and guarantees
            #                            valid columns never read the lane-pad
            #                            columns, so f never needs re-masking).
            if d > 0:
                return jnp.where(col >= d, pltpu.roll(f, shift=d, axis=1), 0.0)
            s = -d
            return jnp.where(col < t_valid - s,
                             pltpu.roll(f, shift=t_pad - s, axis=1), 0.0)

        # conv_1x1_in : f = W_in @ x + b_in   (columns are independent, so the
        # lane-pad columns can hold garbage without affecting valid columns).
        f_sc[...] = jnp.dot(w_in_ref[...], x_ref[...],
                            preferred_element_type=jnp.float32) + b_in_ref[...]

        for i, (d1, d2) in enumerate(dilations):
            f = f_sc[...]
            # Stack the 5 taps along the channel (sublane) axis -> one K=5C dot.
            stk_sc[0 * c:1 * c, :] = f
            stk_sc[1 * c:2 * c, :] = shifted(f, d1)
            stk_sc[2 * c:3 * c, :] = shifted(f, -d1)
            stk_sc[3 * c:4 * c, :] = shifted(f, d2)
            stk_sc[4 * c:5 * c, :] = shifted(f, -d2)
            g = jnp.dot(wl_ref[i], stk_sc[...],
                        preferred_element_type=jnp.float32) + bl_ref[i]
            # ReLU -> dropout (eval = identity) -> residual add.
            f_sc[...] = jnp.maximum(g, 0.0) + f

        # conv_out
        o_ref[...] = (jnp.dot(w_out_ref[...], f_sc[...],
                              preferred_element_type=jnp.float32)
                      + b_out_ref[...]).astype(o_ref.dtype)

    return kernel


# ------------------------------- full forward --------------------------------

@functools.partial(jax.jit, static_argnames=("num_layers",))
def prediction_generation_forward(x, params, num_layers):
    """Forward pass of Prediction_Generation (inference; dropout = identity).

    x: (N, dim, T) -> (N, num_classes, T)
    """
    n, dim, t = x.shape
    c = params["w_in"].shape[0]
    num_classes = params["w_out"].shape[0]
    f32 = jnp.float32

    t_pad = _round_up(max(t, _LANE), _LANE)
    assert 2 ** (num_layers - 1) < t_pad, "max dilation must be < padded length"
    if t_pad != t:
        x = jnp.pad(x, ((0, 0), (0, 0), (0, t_pad - t)))

    # Fold the 1x1 fusion conv into the dilated taps (pure linear identity):
    #   fusion(cat(conv_d1(f), conv_d2(f)))
    #     = (Wf1 W1_c + Wf2 W2_c) f[t]
    #       + (Wf1 W1_-) f[t-d1] + (Wf1 W1_+) f[t+d1]
    #       + (Wf2 W2_-) f[t-d2] + (Wf2 W2_+) f[t+d2]
    #       + (Wf1 b1 + Wf2 b2 + bf)
    # then pack the 5 taps along K -> one (C, 5C) weight per layer.
    w_packed, b_packed = [], []
    for i in range(num_layers):
        w_d1 = params["w_dilated_1"][i].astype(f32)    # (C, C, 3)
        w_d2 = params["w_dilated_2"][i].astype(f32)
        wf = params["w_fusion"][i].astype(f32)         # (C, 2C)
        wf1, wf2 = wf[:, :c], wf[:, c:]
        wc = wf1 @ w_d1[:, :, 1] + wf2 @ w_d2[:, :, 1]
        wm1 = wf1 @ w_d1[:, :, 0]
        wp1 = wf1 @ w_d1[:, :, 2]
        wm2 = wf2 @ w_d2[:, :, 0]
        wp2 = wf2 @ w_d2[:, :, 2]
        w_packed.append(jnp.concatenate([wc, wm1, wp1, wm2, wp2], axis=1))
        b_packed.append(wf1 @ params["b_dilated_1"][i].astype(f32)
                        + wf2 @ params["b_dilated_2"][i].astype(f32)
                        + params["b_fusion"][i].astype(f32))
    w_layers = jnp.stack(w_packed)                      # (L, C, 5C)
    b_layers = jnp.stack(b_packed)[:, :, None]          # (L, C, 1)

    # Pad the output-channel dim to a multiple of 8 -> unmasked sublane stores.
    cout_pad = _round_up(num_classes, _SUBLANE)
    w_out = jnp.zeros((cout_pad, c), f32).at[:num_classes].set(
        params["w_out"].astype(f32))
    b_out = jnp.zeros((cout_pad, 1), f32).at[:num_classes, 0].set(
        params["b_out"].astype(f32))

    out = pl.pallas_call(
        _make_fused_kernel(num_layers, t),
        out_shape=jax.ShapeDtypeStruct((n, cout_pad, t_pad), x.dtype),
        grid_spec=pltpu.PrefetchScalarGridSpec(
            num_scalar_prefetch=0,
            grid=(n,),
            in_specs=[
                pl.BlockSpec((None, dim, t_pad), lambda i: (i, 0, 0)),
                pl.BlockSpec((c, dim), lambda i: (0, 0)),
                pl.BlockSpec((c, 1), lambda i: (0, 0)),
                pl.BlockSpec((num_layers, c, 5 * c), lambda i: (0, 0, 0)),
                pl.BlockSpec((num_layers, c, 1), lambda i: (0, 0, 0)),
                pl.BlockSpec((cout_pad, c), lambda i: (0, 0)),
                pl.BlockSpec((cout_pad, 1), lambda i: (0, 0)),
            ],
            out_specs=pl.BlockSpec((None, cout_pad, t_pad),
                                   lambda i: (i, 0, 0)),
            scratch_shapes=[
                pltpu.VMEM((c, t_pad), jnp.float32),       # resident f
                pltpu.VMEM((5 * c, t_pad), jnp.float32),   # stacked taps
            ],
        ),
        compiler_params=pltpu.CompilerParams(
            dimension_semantics=("parallel",),
            vmem_limit_bytes=_vmem_limit_bytes(dim, c, cout_pad, t_pad,
                                               num_layers),
        ),
    )(x, params["w_in"].astype(f32), params["b_in"].astype(f32)[:, None],
      w_layers, b_layers, w_out, b_out)

    # TODO(synk): training-mode nn.Dropout (p=0.5) not implemented; this is the
    # eval-mode (identity) forward pass.
    return out[:, :num_classes, :t]


# ------------------------------ plain-JAX reference --------------------------

def _ref_conv1d(x, w, b, dilation=1, padding=0):
    out = lax.conv_general_dilated(
        x, w, window_strides=(1,), padding=[(padding, padding)],
        rhs_dilation=(dilation,), dimension_numbers=("NCH", "OIH", "NCH"))
    return out + b[None, :, None]


def reference_forward(x, params, num_layers):
    f = _ref_conv1d(x, params["w_in"][:, :, None], params["b_in"])
    for i in range(num_layers):
        d1 = 2 ** (num_layers - 1 - i)
        d2 = 2 ** i
        y1 = _ref_conv1d(f, params["w_dilated_1"][i], params["b_dilated_1"][i],
                         dilation=d1, padding=d1)
        y2 = _ref_conv1d(f, params["w_dilated_2"][i], params["b_dilated_2"][i],
                         dilation=d2, padding=d2)
        g = _ref_conv1d(jnp.concatenate([y1, y2], axis=1),
                        params["w_fusion"][i][:, :, None],
                        params["b_fusion"][i])
        f = jax.nn.relu(g) + f
    return _ref_conv1d(f, params["w_out"][:, :, None], params["b_out"])


if __name__ == "__main__":
    num_layers = 4
    num_f_maps = 32
    dim = 64
    num_classes = 10
    batch, seq = 2, 200   # seq not a multiple of 128 -> exercises pad + masks

    keys = list(jax.random.split(jax.random.PRNGKey(0), 8 + 6 * num_layers))
    ki = iter(keys)

    def init(shape, scale=0.1):
        return scale * jax.random.normal(next(ki), shape, dtype=jnp.float32)

    params = {
        "w_in": init((num_f_maps, dim)),
        "b_in": init((num_f_maps,)),
        "w_dilated_1": jnp.stack([init((num_f_maps, num_f_maps, 3))
                                  for _ in range(num_layers)]),
        "b_dilated_1": jnp.stack([init((num_f_maps,)) for _ in range(num_layers)]),
        "w_dilated_2": jnp.stack([init((num_f_maps, num_f_maps, 3))
                                  for _ in range(num_layers)]),
        "b_dilated_2": jnp.stack([init((num_f_maps,)) for _ in range(num_layers)]),
        "w_fusion": jnp.stack([init((num_f_maps, 2 * num_f_maps))
                               for _ in range(num_layers)]),
        "b_fusion": jnp.stack([init((num_f_maps,)) for _ in range(num_layers)]),
        "w_out": init((num_classes, num_f_maps)),
        "b_out": init((num_classes,)),
    }

    x = jax.random.normal(next(ki), (batch, dim, seq), dtype=jnp.float32)

    out = prediction_generation_forward(x, params, num_layers=num_layers)
    out = jax.block_until_ready(out)

    ref = reference_forward(x, params, num_layers)
    assert out.shape == (batch, num_classes, seq)
    assert jnp.allclose(out, ref, atol=1e-3, rtol=1e-3), \
        float(jnp.max(jnp.abs(out - ref)))

    print("KERNEL_OK")
</pallas_src>

<mosaic_0001>
module attributes {stable_mosaic.version = 11 : i64} {
  func.func @kernel(%arg0: i32, %arg1: memref<1x64x256xf32, #tpu.memory_space<vmem>>, %arg2: memref<32x64xf32, #tpu.memory_space<vmem>>, %arg3: memref<32x1xf32, #tpu.memory_space<vmem>>, %arg4: memref<4x32x160xf32, #tpu.memory_space<vmem>>, %arg5: memref<4x32x1xf32, #tpu.memory_space<vmem>>, %arg6: memref<16x32xf32, #tpu.memory_space<vmem>>, %arg7: memref<16x1xf32, #tpu.memory_space<vmem>>, %arg8: memref<1x16x256xf32, #tpu.memory_space<vmem>>, %arg9: memref<32x256xf32, #tpu.memory_space<vmem>>, %arg10: memref<160x256xf32, #tpu.memory_space<vmem>>) attributes {dimension_semantics = [#tpu.dimension_semantics<parallel>], iteration_bounds = array<i64: 2>, scalar_prefetch = 0 : i64, scratch_operands = 2 : i64, tpu.core_type = #tpu.core_type<tc>, window_params = [{transform_indices = @transform_0, window_bounds = array<i64: 1, 64, 256>}, {pipeline_mode = #tpu.pipeline_mode<synchronous>, transform_indices = @transform_1, window_bounds = array<i64: 32, 64>}, {pipeline_mode = #tpu.pipeline_mode<synchronous>, transform_indices = @transform_2, window_bounds = array<i64: 32, 1>}, {pipeline_mode = #tpu.pipeline_mode<synchronous>, transform_indices = @transform_3, window_bounds = array<i64: 4, 32, 160>}, {pipeline_mode = #tpu.pipeline_mode<synchronous>, transform_indices = @transform_4, window_bounds = array<i64: 4, 32, 1>}, {pipeline_mode = #tpu.pipeline_mode<synchronous>, transform_indices = @transform_5, window_bounds = array<i64: 16, 32>}, {pipeline_mode = #tpu.pipeline_mode<synchronous>, transform_indices = @transform_6, window_bounds = array<i64: 16, 1>}, {transform_indices = @transform_7, window_bounds = array<i64: 1, 16, 256>}]} {
    %0 = tpu.iota {dimensions = array<i32: 1>} : vector<32x256xi32>
    %c0 = arith.constant 0 : index
    %c0_0 = arith.constant 0 : index
    %1 = vector.load %arg2[%c0, %c0_0] : memref<32x64xf32, #tpu.memory_space<vmem>>, vector<32x64xf32>
    %c0_1 = arith.constant 0 : index
    %c0_2 = arith.constant 0 : index
    %c0_3 = arith.constant 0 : index
    %2 = vector.load %arg1[%c0_1, %c0_2, %c0_3] : memref<1x64x256xf32, #tpu.memory_space<vmem>>, vector<1x64x256xf32>
    %3 = vector.shape_cast %2 : vector<1x64x256xf32> to vector<64x256xf32>
    %cst = arith.constant dense<0.000000e+00> : vector<32x256xf32>
    %4 = tpu.matmul %1, %3, %cst {dimension_numbers = #tpu.dot_dimension_numbers<[1], [0], [0], [1], [0, 0, 1, 1], [], []>} : vector<32x64xf32>, vector<64x256xf32>, vector<32x256xf32> -> vector<32x256xf32>
    %c0_4 = arith.constant 0 : index
    %c0_5 = arith.constant 0 : index
    %5 = vector.load %arg3[%c0_4, %c0_5] : memref<32x1xf32, #tpu.memory_space<vmem>>, vector<32x1xf32>
    %6 = vector.broadcast %5 : vector<32x1xf32> to vector<32x256xf32>
    %7 = arith.addf %4, %6 : vector<32x256xf32>
    %c0_6 = arith.constant 0 : index
    %c0_7 = arith.constant 0 : index
    %8 = vector.load %arg9[%c0_6, %c0_7] : memref<32x256xf32, #tpu.memory_space<vmem>>, vector<32x256xf32>
    tpu.vector_store %arg9[%c0_6, %c0_7], %7 {strides = array<i32>} : memref<32x256xf32, #tpu.memory_space<vmem>>, vector<32x256xf32>,
    %c0_8 = arith.constant 0 : index
    %c0_9 = arith.constant 0 : index
    %9 = vector.load %arg9[%c0_8, %c0_9] : memref<32x256xf32, #tpu.memory_space<vmem>>, vector<32x256xf32>
    %c0_10 = arith.constant 0 : index
    %c0_11 = arith.constant 0 : index
    %10 = vector.load %arg10[%c0_10, %c0_11] : memref<160x256xf32, #tpu.memory_space<vmem>>, vector<32x256xf32>
    tpu.vector_store %arg10[%c0_10, %c0_11], %9 {strides = array<i32>} : memref<160x256xf32, #tpu.memory_space<vmem>>, vector<32x256xf32>,
    %c8_i32 = arith.constant 8 : i32
    %11 = vector.broadcast %c8_i32 : i32 to vector<32x256xi32>
    %12 = arith.cmpi sge, %0, %11 : vector<32x256xi32>
    %c8_i32_12 = arith.constant 8 : i32
    %13 = tpu.dynamic_rotate %9 by %c8_i32_12 dim 1 : vector<32x256xf32>, i32 -> vector<32x256xf32>
    %cst_13 = arith.constant 0.000000e+00 : f32
    %14 = vector.broadcast %cst_13 : f32 to vector<32x256xf32>
    %15 = arith.select %12, %13, %14 : vector<32x256xi1>, vector<32x256xf32>
    %c32 = arith.constant 32 : index
    %c0_14 = arith.constant 0 : index
    %16 = vector.load %arg10[%c32, %c0_14] : memref<160x256xf32, #tpu.memory_space<vmem>>, vector<32x256xf32>
    tpu.vector_store %arg10[%c32, %c0_14], %15 {strides = array<i32>} : memref<160x256xf32, #tpu.memory_space<vmem>>, vector<32x256xf32>,
    %c192_i32 = arith.constant 192 : i32
    %17 = vector.broadcast %c192_i32 : i32 to vector<32x256xi32>
    %18 = arith.cmpi slt, %0, %17 : vector<32x256xi32>
    %c248_i32 = arith.constant 248 : i32
    %19 = tpu.dynamic_rotate %9 by %c248_i32 dim 1 : vector<32x256xf32>, i32 -> vector<32x256xf32>
    %cst_15 = arith.constant 0.000000e+00 : f32
    %20 = vector.broadcast %cst_15 : f32 to vector<32x256xf32>
    %21 = arith.select %18, %19, %20 : vector<32x256xi1>, vector<32x256xf32>
    %c64 = arith.constant 64 : index
    %c0_16 = arith.constant 0 : index
    %22 = vector.load %arg10[%c64, %c0_16] : memref<160x256xf32, #tpu.memory_space<vmem>>, vector<32x256xf32>
    tpu.vector_store %arg10[%c64, %c0_16], %21 {strides = array<i32>} : memref<160x256xf32, #tpu.memory_space<vmem>>, vector<32x256xf32>,
    %c1_i32 = arith.constant 1 : i32
    %23 = vector.broadcast %c1_i32 : i32 to vector<32x256xi32>
    %24 = arith.cmpi sge, %0, %23 : vector<32x256xi32>
    %c1_i32_17 = arith.constant 1 : i32
    %25 = tpu.dynamic_rotate %9 by %c1_i32_17 dim 1 : vector<32x256xf32>, i32 -> vector<32x256xf32>
    %cst_18 = arith.constant 0.000000e+00 : f32
    %26 = vector.broadcast %cst_18 : f32 to vector<32x256xf32>
    %27 = arith.select %24, %25, %26 : vector<32x256xi1>, vector<32x256xf32>
    %c96 = arith.constant 96 : index
    %c0_19 = arith.constant 0 : index
    %28 = vector.load %arg10[%c96, %c0_19] : memref<160x256xf32, #tpu.memory_space<vmem>>, vector<32x256xf32>
    tpu.vector_store %arg10[%c96, %c0_19], %27 {strides = array<i32>} : memref<160x256xf32, #tpu.memory_space<vmem>>, vector<32x256xf32>,
    %c199_i32 = arith.constant 199 : i32
    %29 = vector.broadcast %c199_i32 : i32 to vector<32x256xi32>
    %30 = arith.cmpi slt, %0, %29 : vector<32x256xi32>
    %c255_i32 = arith.constant 255 : i32
    %31 = tpu.dynamic_rotate %9 by %c255_i32 dim 1 : vector<32x256xf32>, i32 -> vector<32x256xf32>
    %cst_20 = arith.constant 0.000000e+00 : f32
    %32 = vector.broadcast %cst_20 : f32 to vector<32x256xf32>
    %33 = arith.select %30, %31, %32 : vector<32x256xi1>, vector<32x256xf32>
    %c128 = arith.constant 128 : index
    %c0_21 = arith.constant 0 : index
    %34 = vector.load %arg10[%c128, %c0_21] : memref<160x256xf32, #tpu.memory_space<vmem>>, vector<32x256xf32>
    tpu.vector_store %arg10[%c128, %c0_21], %33 {strides = array<i32>} : memref<160x256xf32, #tpu.memory_space<vmem>>, vector<32x256xf32>,
    %c0_22 = arith.constant 0 : index
    %c0_23 = arith.constant 0 : index
    %c0_24 = arith.constant 0 : index
    %35 = vector.load %arg4[%c0_22, %c0_23, %c0_24] : memref<4x32x160xf32, #tpu.memory_space<vmem>>, vector<1x32x160xf32>
    %36 = vector.shape_cast %35 : vector<1x32x160xf32> to vector<32x160xf32>
    %c0_25 = arith.constant 0 : index
    %c0_26 = arith.constant 0 : index
    %37 = vector.load %arg10[%c0_25, %c0_26] : memref<160x256xf32, #tpu.memory_space<vmem>>, vector<160x256xf32>
    %cst_27 = arith.constant dense<0.000000e+00> : vector<32x256xf32>
    %38 = tpu.matmul %36, %37, %cst_27 {dimension_numbers = #tpu.dot_dimension_numbers<[1], [0], [0], [1], [0, 0, 1, 1], [], []>} : vector<32x160xf32>, vector<160x256xf32>, vector<32x256xf32> -> vector<32x256xf32>
    %c0_28 = arith.constant 0 : index
    %c0_29 = arith.constant 0 : index
    %c0_30 = arith.constant 0 : index
    %39 = vector.load %arg5[%c0_28, %c0_29, %c0_30] : memref<4x32x1xf32, #tpu.memory_space<vmem>>, vector<1x32x1xf32>
    %40 = vector.shape_cast %39 : vector<1x32x1xf32> to vector<32x1xf32>
    %41 = vector.broadcast %40 : vector<32x1xf32> to vector<32x256xf32>
    %42 = arith.addf %38, %41 : vector<32x256xf32>
    %cst_31 = arith.constant 0.000000e+00 : f32
    %43 = vector.broadcast %cst_31 : f32 to vector<32x256xf32>
    %44 = arith.maximumf %42, %43 : vector<32x256xf32>
    %45 = arith.addf %44, %9 : vector<32x256xf32>
    %c0_32 = arith.constant 0 : index
    %c0_33 = arith.constant 0 : index
    %46 = vector.load %arg9[%c0_32, %c0_33] : memref<32x256xf32, #tpu.memory_space<vmem>>, vector<32x256xf32>
    tpu.vector_store %arg9[%c0_32, %c0_33], %45 {strides = array<i32>} : memref<32x256xf32, #tpu.memory_space<vmem>>, vector<32x256xf32>,
    %c0_34 = arith.constant 0 : index
    %c0_35 = arith.constant 0 : index
    %47 = vector.load %arg9[%c0_34, %c0_35] : memref<32x256xf32, #tpu.memory_space<vmem>>, vector<32x256xf32>
    %c0_36 = arith.constant 0 : index
    %c0_37 = arith.constant 0 : index
    %48 = vector.load %arg10[%c0_36, %c0_37] : memref<160x256xf32, #tpu.memory_space<vmem>>, vector<32x256xf32>
    tpu.vector_store %arg10[%c0_36, %c0_37], %47 {strides = array<i32>} : memref<160x256xf32, #tpu.memory_space<vmem>>, vector<32x256xf32>,
    %c4_i32 = arith.constant 4 : i32
    %49 = vector.broadcast %c4_i32 : i32 to vector<32x256xi32>
    %50 = arith.cmpi sge, %0, %49 : vector<32x256xi32>
    %c4_i32_38 = arith.constant 4 : i32
    %51 = tpu.dynamic_rotate %47 by %c4_i32_38 dim 1 : vector<32x256xf32>, i32 -> vector<32x256xf32>
    %cst_39 = arith.constant 0.000000e+00 : f32
    %52 = vector.broadcast %cst_39 : f32 to vector<32x256xf32>
    %53 = arith.select %50, %51, %52 : vector<32x256xi1>, vector<32x256xf32>
    %c32_40 = arith.constant 32 : index
    %c0_41 = arith.constant 0 : index
    %54 = vector.load %arg10[%c32_40, %c0_41] : memref<160x256xf32, #tpu.memory_space<vmem>>, vector<32x256xf32>
    tpu.vector_store %arg10[%c32_40, %c0_41], %53 {strides = array<i32>} : memref<160x256xf32, #tpu.memory_space<vmem>>, vector<32x256xf32>,
    %c196_i32 = arith.constant 196 : i32
    %55 = vector.broadcast %c196_i32 : i32 to vector<32x256xi32>
    %56 = arith.cmpi slt, %0, %55 : vector<32x256xi32>
    %c252_i32 = arith.constant 252 : i32
    %57 = tpu.dynamic_rotate %47 by %c252_i32 dim 1 : vector<32x256xf32>, i32 -> vector<32x256xf32>
    %cst_42 = arith.constant 0.000000e+00 : f32
    %58 = vector.broadcast %cst_42 : f32 to vector<32x256xf32>
    %59 = arith.select %56, %57, %58 : vector<32x256xi1>, vector<32x256xf32>
    %c64_43 = arith.constant 64 : index
    %c0_44 = arith.constant 0 : index
    %60 = vector.load %arg10[%c64_43, %c0_44] : memref<160x256xf32, #tpu.memory_space<vmem>>, vector<32x256xf32>
    tpu.vector_store %arg10[%c64_43, %c0_44], %59 {strides = array<i32>} : memref<160x256xf32, #tpu.memory_space<vmem>>, vector<32x256xf32>,
    %c2_i32 = arith.constant 2 : i32
    %61 = vector.broadcast %c2_i32 : i32 to vector<32x256xi32>
    %62 = arith.cmpi sge, %0, %61 : vector<32x256xi32>
    %c2_i32_45 = arith.constant 2 : i32
    %63 = tpu.dynamic_rotate %47 by %c2_i32_45 dim 1 : vector<32x256xf32>, i32 -> vector<32x256xf32>
    %cst_46 = arith.constant 0.000000e+00 : f32
    %64 = vector.broadcast %cst_46 : f32 to vector<32x256xf32>
    %65 = arith.select %62, %63, %64 : vector<32x256xi1>, vector<32x256xf32>
    %c96_47 = arith.constant 96 : index
    %c0_48 = arith.constant 0 : index
    %66 = vector.load %arg10[%c96_47, %c0_48] : memref<160x256xf32, #tpu.memory_space<vmem>>, vector<32x256xf32>
    tpu.vector_store %arg10[%c96_47, %c0_48], %65 {strides = array<i32>} : memref<160x256xf32, #tpu.memory_space<vmem>>, vector<32x256xf32>,
    %c198_i32 = arith.constant 198 : i32
    %67 = vector.broadcast %c198_i32 : i32 to vector<32x256xi32>
    %68 = arith.cmpi slt, %0, %67 : vector<32x256xi32>
    %c254_i32 = arith.constant 254 : i32
    %69 = tpu.dynamic_rotate %47 by %c254_i32 dim 1 : vector<32x256xf32>, i32 -> vector<32x256xf32>
    %cst_49 = arith.constant 0.000000e+00 : f32
    %70 = vector.broadcast %cst_49 : f32 to vector<32x256xf32>
    %71 = arith.select %68, %69, %70 : vector<32x256xi1>, vector<32x256xf32>
    %c128_50 = arith.constant 128 : index
    %c0_51 = arith.constant 0 : index
    %72 = vector.load %arg10[%c128_50, %c0_51] : memref<160x256xf32, #tpu.memory_space<vmem>>, vector<32x256xf32>
    tpu.vector_store %arg10[%c128_50, %c0_51], %71 {strides = array<i32>} : memref<160x256xf32, #tpu.memory_space<vmem>>, vector<32x256xf32>,
    %c1 = arith.constant 1 : index
    %c0_52 = arith.constant 0 : index
    %c0_53 = arith.constant 0 : index
    %73 = vector.load %arg4[%c1, %c0_52, %c0_53] : memref<4x32x160xf32, #tpu.memory_space<vmem>>, vector<1x32x160xf32>
    %74 = vector.shape_cast %73 : vector<1x32x160xf32> to vector<32x160xf32>
    %c0_54 = arith.constant 0 : index
    %c0_55 = arith.constant 0 : index
    %75 = vector.load %arg10[%c0_54, %c0_55] : memref<160x256xf32, #tpu.memory_space<vmem>>, vector<160x256xf32>
    %cst_56 = arith.constant dense<0.000000e+00> : vector<32x256xf32>
    %76 = tpu.matmul %74, %75, %cst_56 {dimension_numbers = #tpu.dot_dimension_numbers<[1], [0], [0], [1], [0, 0, 1, 1], [], []>} : vector<32x160xf32>, vector<160x256xf32>, vector<32x256xf32> -> vector<32x256xf32>
    %c1_57 = arith.constant 1 : index
    %c0_58 = arith.constant 0 : index
    %c0_59 = arith.constant 0 : index
    %77 = vector.load %arg5[%c1_57, %c0_58, %c0_59] : memref<4x32x1xf32, #tpu.memory_space<vmem>>, vector<1x32x1xf32>
    %78 = vector.shape_cast %77 : vector<1x32x1xf32> to vector<32x1xf32>
    %79 = vector.broadcast %78 : vector<32x1xf32> to vector<32x256xf32>
    %80 = arith.addf %76, %79 : vector<32x256xf32>
    %cst_60 = arith.constant 0.000000e+00 : f32
    %81 = vector.broadcast %cst_60 : f32 to vector<32x256xf32>
    %82 = arith.maximumf %80, %81 : vector<32x256xf32>
    %83 = arith.addf %82, %47 : vector<32x256xf32>
    %c0_61 = arith.constant 0 : index
    %c0_62 = arith.constant 0 : index
    %84 = vector.load %arg9[%c0_61, %c0_62] : memref<32x256xf32, #tpu.memory_space<vmem>>, vector<32x256xf32>
    tpu.vector_store %arg9[%c0_61, %c0_62], %83 {strides = array<i32>} : memref<32x256xf32, #tpu.memory_space<vmem>>, vector<32x256xf32>,
    %c0_63 = arith.constant 0 : index
    %c0_64 = arith.constant 0 : index
    %85 = vector.load %arg9[%c0_63, %c0_64] : memref<32x256xf32, #tpu.memory_space<vmem>>, vector<32x256xf32>
    %c0_65 = arith.constant 0 : index
    %c0_66 = arith.constant 0 : index
    %86 = vector.load %arg10[%c0_65, %c0_66] : memref<160x256xf32, #tpu.memory_space<vmem>>, vector<32x256xf32>
    tpu.vector_store %arg10[%c0_65, %c0_66], %85 {strides = array<i32>} : memref<160x256xf32, #tpu.memory_space<vmem>>, vector<32x256xf32>,
    %c2_i32_67 = arith.constant 2 : i32
    %87 = vector.broadcast %c2_i32_67 : i32 to vector<32x256xi32>
    %88 = arith.cmpi sge, %0, %87 : vector<32x256xi32>
    %c2_i32_68 = arith.constant 2 : i32
    %89 = tpu.dynamic_rotate %85 by %c2_i32_68 dim 1 : vector<32x256xf32>, i32 -> vector<32x256xf32>
    %cst_69 = arith.constant 0.000000e+00 : f32
    %90 = vector.broadcast %cst_69 : f32 to vector<32x256xf32>
    %91 = arith.select %88, %89, %90 : vector<32x256xi1>, vector<32x256xf32>
    %c32_70 = arith.constant 32 : index
    %c0_71 = arith.constant 0 : index
    %92 = vector.load %arg10[%c32_70, %c0_71] : memref<160x256xf32, #tpu.memory_space<vmem>>, vector<32x256xf32>
    tpu.vector_store %arg10[%c32_70, %c0_71], %91 {strides = array<i32>} : memref<160x256xf32, #tpu.memory_space<vmem>>, vector<32x256xf32>,
    %c198_i32_72 = arith.constant 198 : i32
    %93 = vector.broadcast %c198_i32_72 : i32 to vector<32x256xi32>
    %94 = arith.cmpi slt, %0, %93 : vector<32x256xi32>
    %c254_i32_73 = arith.constant 254 : i32
    %95 = tpu.dynamic_rotate %85 by %c254_i32_73 dim 1 : vector<32x256xf32>, i32 -> vector<32x256xf32>
    %cst_74 = arith.constant 0.000000e+00 : f32
    %96 = vector.broadcast %cst_74 : f32 to vector<32x256xf32>
    %97 = arith.select %94, %95, %96 : vector<32x256xi1>, vector<32x256xf32>
    %c64_75 = arith.constant 64 : index
    %c0_76 = arith.constant 0 : index
    %98 = vector.load %arg10[%c64_75, %c0_76] : memref<160x256xf32, #tpu.memory_space<vmem>>, vector<32x256xf32>
    tpu.vector_store %arg10[%c64_75, %c0_76], %97 {strides = array<i32>} : memref<160x256xf32, #tpu.memory_space<vmem>>, vector<32x256xf32>,
    %c4_i32_77 = arith.constant 4 : i32
    %99 = vector.broadcast %c4_i32_77 : i32 to vector<32x256xi32>
    %100 = arith.cmpi sge, %0, %99 : vector<32x256xi32>
    %c4_i32_78 = arith.constant 4 : i32
    %101 = tpu.dynamic_rotate %85 by %c4_i32_78 dim 1 : vector<32x256xf32>, i32 -> vector<32x256xf32>
    %cst_79 = arith.constant 0.000000e+00 : f32
    %102 = vector.broadcast %cst_79 : f32 to vector<32x256xf32>
    %103 = arith.select %100, %101, %102 : vector<32x256xi1>, vector<32x256xf32>
    %c96_80 = arith.constant 96 : index
    %c0_81 = arith.constant 0 : index
    %104 = vector.load %arg10[%c96_80, %c0_81] : memref<160x256xf32, #tpu.memory_space<vmem>>, vector<32x256xf32>
    tpu.vector_store %arg10[%c96_80, %c0_81], %103 {strides = array<i32>} : memref<160x256xf32, #tpu.memory_space<vmem>>, vector<32x256xf32>,
    %c196_i32_82 = arith.constant 196 : i32
    %105 = vector.broadcast %c196_i32_82 : i32 to vector<32x256xi32>
    %106 = arith.cmpi slt, %0, %105 : vector<32x256xi32>
    %c252_i32_83 = arith.constant 252 : i32
    %107 = tpu.dynamic_rotate %85 by %c252_i32_83 dim 1 : vector<32x256xf32>, i32 -> vector<32x256xf32>
    %cst_84 = arith.constant 0.000000e+00 : f32
    %108 = vector.broadcast %cst_84 : f32 to vector<32x256xf32>
    %109 = arith.select %106, %107, %108 : vector<32x256xi1>, vector<32x256xf32>
    %c128_85 = arith.constant 128 : index
    %c0_86 = arith.constant 0 : index
    %110 = vector.load %arg10[%c128_85, %c0_86] : memref<160x256xf32, #tpu.memory_space<vmem>>, vector<32x256xf32>
    tpu.vector_store %arg10[%c128_85, %c0_86], %109 {strides = array<i32>} : memref<160x256xf32, #tpu.memory_space<vmem>>, vector<32x256xf32>,
    %c2 = arith.constant 2 : index
    %c0_87 = arith.constant 0 : index
    %c0_88 = arith.constant 0 : index
    %111 = vector.load %arg4[%c2, %c0_87, %c0_88] : memref<4x32x160xf32, #tpu.memory_space<vmem>>, vector<1x32x160xf32>
    %112 = vector.shape_cast %111 : vector<1x32x160xf32> to vector<32x160xf32>
    %c0_89 = arith.constant 0 : index
    %c0_90 = arith.constant 0 : index
    %113 = vector.load %arg10[%c0_89, %c0_90] : memref<160x256xf32, #tpu.memory_space<vmem>>, vector<160x256xf32>
    %cst_91 = arith.constant dense<0.000000e+00> : vector<32x256xf32>
    %114 = tpu.matmul %112, %113, %cst_91 {dimension_numbers = #tpu.dot_dimension_numbers<[1], [0], [0], [1], [0, 0, 1, 1], [], []>} : vector<32x160xf32>, vector<160x256xf32>, vector<32x256xf32> -> vector<32x256xf32>
    %c2_92 = arith.constant 2 : index
    %c0_93 = arith.constant 0 : index
    %c0_94 = arith.constant 0 : index
    %115 = vector.load %arg5[%c2_92, %c0_93, %c0_94] : memref<4x32x1xf32, #tpu.memory_space<vmem>>, vector<1x32x1xf32>
    %116 = vector.shape_cast %115 : vector<1x32x1xf32> to vector<32x1xf32>
    %117 = vector.broadcast %116 : vector<32x1xf32> to vector<32x256xf32>
    %118 = arith.addf %114, %117 : vector<32x256xf32>
    %cst_95 = arith.constant 0.000000e+00 : f32
    %119 = vector.broadcast %cst_95 : f32 to vector<32x256xf32>
    %120 = arith.maximumf %118, %119 : vector<32x256xf32>
    %121 = arith.addf %120, %85 : vector<32x256xf32>
    %c0_96 = arith.constant 0 : index
    %c0_97 = arith.constant 0 : index
    %122 = vector.load %arg9[%c0_96, %c0_97] : memref<32x256xf32, #tpu.memory_space<vmem>>, vector<32x256xf32>
    tpu.vector_store %arg9[%c0_96, %c0_97], %121 {strides = array<i32>} : memref<32x256xf32, #tpu.memory_space<vmem>>, vector<32x256xf32>,
    %c0_98 = arith.constant 0 : index
    %c0_99 = arith.constant 0 : index
    %123 = vector.load %arg9[%c0_98, %c0_99] : memref<32x256xf32, #tpu.memory_space<vmem>>, vector<32x256xf32>
    %c0_100 = arith.constant 0 : index
    %c0_101 = arith.constant 0 : index
    %124 = vector.load %arg10[%c0_100, %c0_101] : memref<160x256xf32, #tpu.memory_space<vmem>>, vector<32x256xf32>
    tpu.vector_store %arg10[%c0_100, %c0_101], %123 {strides = array<i32>} : memref<160x256xf32, #tpu.memory_space<vmem>>, vector<32x256xf32>,
    %c1_i32_102 = arith.constant 1 : i32
    %125 = vector.broadcast %c1_i32_102 : i32 to vector<32x256xi32>
    %126 = arith.cmpi sge, %0, %125 : vector<32x256xi32>
    %c1_i32_103 = arith.constant 1 : i32
    %127 = tpu.dynamic_rotate %123 by %c1_i32_103 dim 1 : vector<32x256xf32>, i32 -> vector<32x256xf32>
    %cst_104 = arith.constant 0.000000e+00 : f32
    %128 = vector.broadcast %cst_104 : f32 to vector<32x256xf32>
    %129 = arith.select %126, %127, %128 : vector<32x256xi1>, vector<32x256xf32>
    %c32_105 = arith.constant 32 : index
    %c0_106 = arith.constant 0 : index
    %130 = vector.load %arg10[%c32_105, %c0_106] : memref<160x256xf32, #tpu.memory_space<vmem>>, vector<32x256xf32>
    tpu.vector_store %arg10[%c32_105, %c0_106], %129 {strides = array<i32>} : memref<160x256xf32, #tpu.memory_space<vmem>>, vector<32x256xf32>,
    %c199_i32_107 = arith.constant 199 : i32
    %131 = vector.broadcast %c199_i32_107 : i32 to vector<32x256xi32>
    %132 = arith.cmpi slt, %0, %131 : vector<32x256xi32>
    %c255_i32_108 = arith.constant 255 : i32
    %133 = tpu.dynamic_rotate %123 by %c255_i32_108 dim 1 : vector<32x256xf32>, i32 -> vector<32x256xf32>
    %cst_109 = arith.constant 0.000000e+00 : f32
    %134 = vector.broadcast %cst_109 : f32 to vector<32x256xf32>
    %135 = arith.select %132, %133, %134 : vector<32x256xi1>, vector<32x256xf32>
    %c64_110 = arith.constant 64 : index
    %c0_111 = arith.constant 0 : index
    %136 = vector.load %arg10[%c64_110, %c0_111] : memref<160x256xf32, #tpu.memory_space<vmem>>, vector<32x256xf32>
    tpu.vector_store %arg10[%c64_110, %c0_111], %135 {strides = array<i32>} : memref<160x256xf32, #tpu.memory_space<vmem>>, vector<32x256xf32>,
    %c8_i32_112 = arith.constant 8 : i32
    %137 = vector.broadcast %c8_i32_112 : i32 to vector<32x256xi32>
    %138 = arith.cmpi sge, %0, %137 : vector<32x256xi32>
    %c8_i32_113 = arith.constant 8 : i32
    %139 = tpu.dynamic_rotate %123 by %c8_i32_113 dim 1 : vector<32x256xf32>, i32 -> vector<32x256xf32>
    %cst_114 = arith.constant 0.000000e+00 : f32
    %140 = vector.broadcast %cst_114 : f32 to vector<32x256xf32>
    %141 = arith.select %138, %139, %140 : vector<32x256xi1>, vector<32x256xf32>
    %c96_115 = arith.constant 96 : index
    %c0_116 = arith.constant 0 : index
    %142 = vector.load %arg10[%c96_115, %c0_116] : memref<160x256xf32, #tpu.memory_space<vmem>>, vector<32x256xf32>
    tpu.vector_store %arg10[%c96_115, %c0_116], %141 {strides = array<i32>} : memref<160x256xf32, #tpu.memory_space<vmem>>, vector<32x256xf32>,
    %c192_i32_117 = arith.constant 192 : i32
    %143 = vector.broadcast %c192_i32_117 : i32 to vector<32x256xi32>
    %144 = arith.cmpi slt, %0, %143 : vector<32x256xi32>
    %c248_i32_118 = arith.constant 248 : i32
    %145 = tpu.dynamic_rotate %123 by %c248_i32_118 dim 1 : vector<32x256xf32>, i32 -> vector<32x256xf32>
    %cst_119 = arith.constant 0.000000e+00 : f32
    %146 = vector.broadcast %cst_119 : f32 to vector<32x256xf32>
    %147 = arith.select %144, %145, %146 : vector<32x256xi1>, vector<32x256xf32>
    %c128_120 = arith.constant 128 : index
    %c0_121 = arith.constant 0 : index
    %148 = vector.load %arg10[%c128_120, %c0_121] : memref<160x256xf32, #tpu.memory_space<vmem>>, vector<32x256xf32>
    tpu.vector_store %arg10[%c128_120, %c0_121], %147 {strides = array<i32>} : memref<160x256xf32, #tpu.memory_space<vmem>>, vector<32x256xf32>,
    %c3 = arith.constant 3 : index
    %c0_122 = arith.constant 0 : index
    %c0_123 = arith.constant 0 : index
    %149 = vector.load %arg4[%c3, %c0_122, %c0_123] : memref<4x32x160xf32, #tpu.memory_space<vmem>>, vector<1x32x160xf32>
    %150 = vector.shape_cast %149 : vector<1x32x160xf32> to vector<32x160xf32>
    %c0_124 = arith.constant 0 : index
    %c0_125 = arith.constant 0 : index
    %151 = vector.load %arg10[%c0_124, %c0_125] : memref<160x256xf32, #tpu.memory_space<vmem>>, vector<160x256xf32>
    %cst_126 = arith.constant dense<0.000000e+00> : vector<32x256xf32>
    %152 = tpu.matmul %150, %151, %cst_126 {dimension_numbers = #tpu.dot_dimension_numbers<[1], [0], [0], [1], [0, 0, 1, 1], [], []>} : vector<32x160xf32>, vector<160x256xf32>, vector<32x256xf32> -> vector<32x256xf32>
    %c3_127 = arith.constant 3 : index
    %c0_128 = arith.constant 0 : index
    %c0_129 = arith.constant 0 : index
    %153 = vector.load %arg5[%c3_127, %c0_128, %c0_129] : memref<4x32x1xf32, #tpu.memory_space<vmem>>, vector<1x32x1xf32>
    %154 = vector.shape_cast %153 : vector<1x32x1xf32> to vector<32x1xf32>
    %155 = vector.broadcast %154 : vector<32x1xf32> to vector<32x256xf32>
    %156 = arith.addf %152, %155 : vector<32x256xf32>
    %cst_130 = arith.constant 0.000000e+00 : f32
    %157 = vector.broadcast %cst_130 : f32 to vector<32x256xf32>
    %158 = arith.maximumf %156, %157 : vector<32x256xf32>
    %159 = arith.addf %158, %123 : vector<32x256xf32>
    %c0_131 = arith.constant 0 : index
    %c0_132 = arith.constant 0 : index
    %160 = vector.load %arg9[%c0_131, %c0_132] : memref<32x256xf32, #tpu.memory_space<vmem>>, vector<32x256xf32>
    tpu.vector_store %arg9[%c0_131, %c0_132], %159 {strides = array<i32>} : memref<32x256xf32, #tpu.memory_space<vmem>>, vector<32x256xf32>,
    %c0_133 = arith.constant 0 : index
    %c0_134 = arith.constant 0 : index
    %161 = vector.load %arg6[%c0_133, %c0_134] : memref<16x32xf32, #tpu.memory_space<vmem>>, vector<16x32xf32>
    %c0_135 = arith.constant 0 : index
    %c0_136 = arith.constant 0 : index
    %162 = vector.load %arg9[%c0_135, %c0_136] : memref<32x256xf32, #tpu.memory_space<vmem>>, vector<32x256xf32>
    %cst_137 = arith.constant dense<0.000000e+00> : vector<16x256xf32>
    %163 = tpu.matmul %161, %162, %cst_137 {dimension_numbers = #tpu.dot_dimension_numbers<[1], [0], [0], [1], [0, 0, 1, 1], [], []>} : vector<16x32xf32>, vector<32x256xf32>, vector<16x256xf32> -> vector<16x256xf32>
    %c0_138 = arith.constant 0 : index
    %c0_139 = arith.constant 0 : index
    %164 = vector.load %arg7[%c0_138, %c0_139] : memref<16x1xf32, #tpu.memory_space<vmem>>, vector<16x1xf32>
    %165 = vector.broadcast %164 : vector<16x1xf32> to vector<16x256xf32>
    %166 = arith.addf %163, %165 : vector<16x256xf32>
    %c0_140 = arith.constant 0 : index
    %c0_141 = arith.constant 0 : index
    %c0_142 = arith.constant 0 : index
    %167 = vector.load %arg8[%c0_140, %c0_141, %c0_142] : memref<1x16x256xf32, #tpu.memory_space<vmem>>, vector<1x16x256xf32>
    %168 = vector.shape_cast %167 : vector<1x16x256xf32> to vector<16x256xf32>
    %169 = vector.shape_cast %166 : vector<16x256xf32> to vector<1x16x256xf32>
    tpu.vector_store %arg8[%c0_140, %c0_141, %c0_142], %169 {strides = array<i32>} : memref<1x16x256xf32, #tpu.memory_space<vmem>>, vector<1x16x256xf32>,
    return
  }
  func.func @transform_0(%arg0: i32) -> (i32, i32, i32) {
    %c0_i32 = arith.constant 0 : i32
    %c0_i32_0 = arith.constant 0 : i32
    %c0_i32_1 = arith.constant 0 : i32
    return %arg0, %c0_i32, %c0_i32_0 : i32, i32, i32
  }
  func.func @transform_1(%arg0: i32) -> (i32, i32) {
    %c0_i32 = arith.constant 0 : i32
    %c0_i32_0 = arith.constant 0 : i32
    %c0_i32_1 = arith.constant 0 : i32
    return %c0_i32, %c0_i32_0 : i32, i32
  }
  func.func @transform_2(%arg0: i32) -> (i32, i32) {
    %c0_i32 = arith.constant 0 : i32
    %c0_i32_0 = arith.constant 0 : i32
    %c0_i32_1 = arith.constant 0 : i32
    return %c0_i32, %c0_i32_0 : i32, i32
  }
  func.func @transform_3(%arg0: i32) -> (i32, i32, i32) {
    %c0_i32 = arith.constant 0 : i32
    %c0_i32_0 = arith.constant 0 : i32
    %c0_i32_1 = arith.constant 0 : i32
    %c0_i32_2 = arith.constant 0 : i32
    return %c0_i32, %c0_i32_0, %c0_i32_1 : i32, i32, i32
  }
  func.func @transform_4(%arg0: i32) -> (i32, i32, i32) {
    %c0_i32 = arith.constant 0 : i32
    %c0_i32_0 = arith.constant 0 : i32
    %c0_i32_1 = arith.constant 0 : i32
    %c0_i32_2 = arith.constant 0 : i32
    return %c0_i32, %c0_i32_0, %c0_i32_1 : i32, i32, i32
  }
  func.func @transform_5(%arg0: i32) -> (i32, i32) {
    %c0_i32 = arith.constant 0 : i32
    %c0_i32_0 = arith.constant 0 : i32
    %c0_i32_1 = arith.constant 0 : i32
    return %c0_i32, %c0_i32_0 : i32, i32
  }
  func.func @transform_6(%arg0: i32) -> (i32, i32) {
    %c0_i32 = arith.constant 0 : i32
    %c0_i32_0 = arith.constant 0 : i32
    %c0_i32_1 = arith.constant 0 : i32
    return %c0_i32, %c0_i32_0 : i32, i32
  }
  func.func @transform_7(%arg0: i32) -> (i32, i32, i32) {
    %c0_i32 = arith.constant 0 : i32
    %c0_i32_0 = arith.constant 0 : i32
    %c0_i32_1 = arith.constant 0 : i32
    return %arg0, %c0_i32, %c0_i32_0 : i32, i32, i32
  }
}

</mosaic_0001>

<llo_original>
// kernel: prediction_generation_forward.1
$region0: #{prediction_generation_forward.1}
  #allocation0 [shape = 'u32[]', space=smem, size = 0x4, offset = 0x4, fixed_abs, tag = 'smem constant byte address 0x4 - core index']
  #allocation1 [shape = 'u32[144,128]{1,0:T(1,128)}', space=vmem, size = 0x12000, scoped, tag = 'internal scratch']
  #allocation2 [shape = 'f32[32,256]{1,0:T(8,128)}', space=vmem, size = 0x8000, scoped, tag = 'scratch operand']
  #allocation3 [shape = 'f32[160,256]{1,0:T(8,128)}', space=vmem, size = 0x28000, scoped, tag = 'scratch operand']
  %s0 = inlined_call_operand.vmem [shape: f32[2,64,256], index: 0, kind: input, shape index: {}]
  %s1 = inlined_call_operand.vmem [shape: f32[32,64], index: 1, kind: input, shape index: {}]
  %s2 = inlined_call_operand.vmem [shape: f32[32,1], index: 2, kind: input, shape index: {}]
  %s3 = inlined_call_operand.vmem [shape: f32[4,32,160], index: 3, kind: input, shape index: {}]
  %s4 = inlined_call_operand.vmem [shape: f32[4,32,1], index: 4, kind: input, shape index: {}]
  %s5 = inlined_call_operand.vmem [shape: f32[16,32], index: 5, kind: input, shape index: {}]
  %s6 = inlined_call_operand.vmem [shape: f32[16,1], index: 6, kind: input, shape index: {}]
  %s7 = inlined_call_operand.vmem [shape: f32[2,16,256], index: 7, kind: output, shape index: {}]
  %s8 = sld [smem:[#allocation0]]
  $region61: #{prediction_generation_forward.1} parent=0
    _
  %s10 = ssub.s32 1, %s8
  %s11 = scalar_select 0, %s10, %s8
  loop: start=0, step=1, limit=4
  $region2: #{prediction_generation_forward.1} parent=0 // loop_pre_header
    _
  $region3: #{prediction_generation_forward.1} parent=0 // loop_header
    %s13 = sphi 0, %s17
    %p14 = scmp.ge.s32.totalorder %s13, 4
    %s23 = sphi 0, %s25
    %s26 = sphi 0, %s23
    %s27 = sphi 0, %s26
    %s43 = sphi 0, %s27
    %s47 = sphi 0, %s47
    %s49 = sphi 0, %s47
    %s50 = sphi 0, %s49
    %s64 = sphi 0, %s50
    %s68 = sphi 0, %s68
    %s70 = sphi 0, %s68
    %s71 = sphi 0, %s70
    %s85 = sphi 0, %s71
    %s89 = sphi 0, %s89
    %s91 = sphi 0, %s89
    %s92 = sphi 0, %s91
    %s106 = sphi 0, %s92
    %s110 = sphi 0, %s110
    %s112 = sphi 0, %s110
    %s113 = sphi 0, %s112
    %s127 = sphi 0, %s113
    %s131 = sphi 0, %s131
    %s133 = sphi 0, %s131
    %s134 = sphi 0, %s133
    %s148 = sphi 0, %s134
    %s152 = sphi 0, %s152
    %s154 = sphi 0, %s152
    %s155 = sphi 0, %s154
    %s169 = sphi 0, %s155
    %s175 = sphi 0, %s177
    %s178 = sphi 0, %s175
    %s179 = sphi 0, %s178
    %s195 = sphi 0, %s179
  $region4: #{prediction_generation_forward.1} parent=0 // loop_header_branch
    %16 = sbr.rel (%p14) target = $region8
  $region5: #{prediction_generation_forward.1} parent=0 // loop_body
    %s18 = ssub.s32 %s13, 1
    %s19 = ssub.s32 %s13, 2
    %s20 = sadd.s32 %s13, 1
    %s21 = ssub.s32 %s13, %s20
    %p22 = scmp.eq.s32.totalorder %s21, 0
    %s24 = sadd.s32 %s23, 1
    %s25 = scalar_select %p22, %s23, %s24
    %p28 = pneg %p22
    %p29 = scmp.eq.s32.totalorder %s13, 1
    %p30 = por %p28, %p29
    %p31 = scmp.ne.s32.totalorder %s23, %s26
    %p32 = scmp.eq.s32.totalorder %s13, 0
    %p33 = por %p31, %p32
    %p34 = scmp.ne.s32.totalorder %s23, %s26
    %p35 = scmp.eq.s32.totalorder %s18, 1
    %p36 = por %p34, %p35
    %p37 = scmp.ne.s32.totalorder %s26, %s27
    %p38 = scmp.eq.s32.totalorder %s18, 0
    %p39 = por %p37, %p38
    %p40 = scmp.ne.s32.totalorder %s26, %s27
    %p41 = scmp.eq.s32.totalorder %s19, 1
    %p42 = por %p40, %p41
    %p44 = scmp.ne.s32.totalorder %s27, %s43
    %p45 = scmp.eq.s32.totalorder %s19, 0
    %p46 = por %p44, %p45
    %s48 = sadd.s32 %s47, 1
    %p51 = scmp.eq.s32.totalorder %s13, 1
    %p52 = scmp.ne.s32.totalorder %s47, %s49
    %p53 = scmp.eq.s32.totalorder %s13, 0
    %p54 = por %p52, %p53
    %p55 = scmp.ne.s32.totalorder %s47, %s49
    %p56 = scmp.eq.s32.totalorder %s18, 1
    %p57 = por %p55, %p56
    %p58 = scmp.ne.s32.totalorder %s49, %s50
    %p59 = scmp.eq.s32.totalorder %s18, 0
    %p60 = por %p58, %p59
    %p61 = scmp.ne.s32.totalorder %s49, %s50
    %p62 = scmp.eq.s32.totalorder %s19, 1
    %p63 = por %p61, %p62
    %p65 = scmp.ne.s32.totalorder %s50, %s64
    %p66 = scmp.eq.s32.totalorder %s19, 0
    %p67 = por %p65, %p66
    %s69 = sadd.s32 %s68, 1
    %p72 = scmp.eq.s32.totalorder %s13, 1
    %p73 = scmp.ne.s32.totalorder %s68, %s70
    %p74 = scmp.eq.s32.totalorder %s13, 0
    %p75 = por %p73, %p74
    %p76 = scmp.ne.s32.totalorder %s68, %s70
    %p77 = scmp.eq.s32.totalorder %s18, 1
    %p78 = por %p76, %p77
    %p79 = scmp.ne.s32.totalorder %s70, %s71
    %p80 = scmp.eq.s32.totalorder %s18, 0
    %p81 = por %p79, %p80
    %p82 = scmp.ne.s32.totalorder %s70, %s71
    %p83 = scmp.eq.s32.totalorder %s19, 1
    %p84 = por %p82, %p83
    %p86 = scmp.ne.s32.totalorder %s71, %s85
    %p87 = scmp.eq.s32.totalorder %s19, 0
    %p88 = por %p86, %p87
    %s90 = sadd.s32 %s89, 1
    %p93 = scmp.eq.s32.totalorder %s13, 1
    %p94 = scmp.ne.s32.totalorder %s89, %s91
    %p95 = scmp.eq.s32.totalorder %s13, 0
    %p96 = por %p94, %p95
    %p97 = scmp.ne.s32.totalorder %s89, %s91
    %p98 = scmp.eq.s32.totalorder %s18, 1
    %p99 = por %p97, %p98
    %p100 = scmp.ne.s32.totalorder %s91, %s92
    %p101 = scmp.eq.s32.totalorder %s18, 0
    %p102 = por %p100, %p101
    %p103 = scmp.ne.s32.totalorder %s91, %s92
    %p104 = scmp.eq.s32.totalorder %s19, 1
    %p105 = por %p103, %p104
    %p107 = scmp.ne.s32.totalorder %s92, %s106
    %p108 = scmp.eq.s32.totalorder %s19, 0
    %p109 = por %p107, %p108
    %s111 = sadd.s32 %s110, 1
    %p114 = scmp.eq.s32.totalorder %s13, 1
    %p115 = scmp.ne.s32.totalorder %s110, %s112
    %p116 = scmp.eq.s32.totalorder %s13, 0
    %p117 = por %p115, %p116
    %p118 = scmp.ne.s32.totalorder %s110, %s112
    %p119 = scmp.eq.s32.totalorder %s18, 1
    %p120 = por %p118, %p119
    %p121 = scmp.ne.s32.totalorder %s112, %s113
    %p122 = scmp.eq.s32.totalorder %s18, 0
    %p123 = por %p121, %p122
    %p124 = scmp.ne.s32.totalorder %s112, %s113
    %p125 = scmp.eq.s32.totalorder %s19, 1
    %p126 = por %p124, %p125
    %p128 = scmp.ne.s32.totalorder %s113, %s127
    %p129 = scmp.eq.s32.totalorder %s19, 0
    %p130 = por %p128, %p129
    %s132 = sadd.s32 %s131, 1
    %p135 = scmp.eq.s32.totalorder %s13, 1
    %p136 = scmp.ne.s32.totalorder %s131, %s133
    %p137 = scmp.eq.s32.totalorder %s13, 0
    %p138 = por %p136, %p137
    %p139 = scmp.ne.s32.totalorder %s131, %s133
    %p140 = scmp.eq.s32.totalorder %s18, 1
    %p141 = por %p139, %p140
    %p142 = scmp.ne.s32.totalorder %s133, %s134
    %p143 = scmp.eq.s32.totalorder %s18, 0
    %p144 = por %p142, %p143
    %p145 = scmp.ne.s32.totalorder %s133, %s134
    %p146 = scmp.eq.s32.totalorder %s19, 1
    %p147 = por %p145, %p146
    %p149 = scmp.ne.s32.totalorder %s134, %s148
    %p150 = scmp.eq.s32.totalorder %s19, 0
    %p151 = por %p149, %p150
    %s153 = sadd.s32 %s152, 1
    %p156 = scmp.eq.s32.totalorder %s13, 1
    %p157 = scmp.ne.s32.totalorder %s152, %s154
    %p158 = scmp.eq.s32.totalorder %s13, 0
    %p159 = por %p157, %p158
    %p160 = scmp.ne.s32.totalorder %s152, %s154
    %p161 = scmp.eq.s32.totalorder %s18, 1
    %p162 = por %p160, %p161
    %p163 = scmp.ne.s32.totalorder %s154, %s155
    %p164 = scmp.eq.s32.totalorder %s18, 0
    %p165 = por %p163, %p164
    %p166 = scmp.ne.s32.totalorder %s154, %s155
    %p167 = scmp.eq.s32.totalorder %s19, 1
    %p168 = por %p166, %p167
    %p170 = scmp.ne.s32.totalorder %s155, %s169
    %p171 = scmp.eq.s32.totalorder %s19, 0
    %p172 = por %p170, %p171
    %s173 = ssub.s32 %s13, %s20
    %p174 = scmp.eq.s32.totalorder %s173, 0
    %s176 = sadd.s32 %s175, 1
    %s177 = scalar_select %p174, %s175, %s176
    %p180 = pneg %p174
    %p181 = scmp.eq.s32.totalorder %s13, 1
    %p182 = por %p180, %p181
    %p183 = scmp.ne.s32.totalorder %s175, %s178
    %p184 = scmp.eq.s32.totalorder %s13, 0
    %p185 = por %p183, %p184
    %p186 = scmp.ne.s32.totalorder %s175, %s178
    %p187 = scmp.eq.s32.totalorder %s18, 1
    %p188 = por %p186, %p187
    %p189 = scmp.ne.s32.totalorder %s178, %s179
    %p190 = scmp.eq.s32.totalorder %s18, 0
    %p191 = por %p189, %p190
    %p192 = scmp.ne.s32.totalorder %s178, %s179
    %p193 = scmp.eq.s32.totalorder %s19, 1
    %p194 = por %p192, %p193
    %p196 = scmp.ne.s32.totalorder %s179, %s195
    %p197 = scmp.eq.s32.totalorder %s19, 0
    %p198 = por %p196, %p197
    %p199 = scmp.le.s32.totalorder 1, %s13
    %p200 = scmp.lt.s32.totalorder %s13, 3
    %p201 = pnand %p199, %p200
    %p202 = pneg %p201
    // Predicated region
    $region9: #{prediction_generation_forward.1} parent=5 // pred_check
      _
    $region10: #{prediction_generation_forward.1} parent=5 // pred_check_branch
      %204 = sbr.rel (%p201) target = $region12
    $region11: #{prediction_generation_forward.1} parent=5 // pred_region
      %s205 = ssub.s32 %s13, 1
      // Predicated region
      $region13: #{prediction_generation_forward.1} parent=11 // pred_check
        %p206 = pneg %p60
      $region14: #{prediction_generation_forward.1} parent=11 // pred_check_branch
        %208 = sbr.rel (%p206) target = $region16
      $region15: #{prediction_generation_forward.1} parent=11 // pred_region
        _
      $region16: #{prediction_generation_forward.1} parent=11 // pred_fallthru
        _
      // Predicated region
      $region17: #{prediction_generation_forward.1} parent=11 // pred_check
        %p209 = pneg %p81
      $region18: #{prediction_generation_forward.1} parent=11 // pred_check_branch
        %211 = sbr.rel (%p209) target = $region20
      $region19: #{prediction_generation_forward.1} parent=11 // pred_region
        _
      $region20: #{prediction_generation_forward.1} parent=11 // pred_fallthru
        _
      // Predicated region
      $region21: #{prediction_generation_forward.1} parent=11 // pred_check
        %p212 = pneg %p102
      $region22: #{prediction_generation_forward.1} parent=11 // pred_check_branch
        %214 = sbr.rel (%p212) target = $region24
      $region23: #{prediction_generation_forward.1} parent=11 // pred_region
        _
      $region24: #{prediction_generation_forward.1} parent=11 // pred_fallthru
        _
      // Predicated region
      $region25: #{prediction_generation_forward.1} parent=11 // pred_check
        %p215 = pneg %p123
      $region26: #{prediction_generation_forward.1} parent=11 // pred_check_branch
        %217 = sbr.rel (%p215) target = $region28
      $region27: #{prediction_generation_forward.1} parent=11 // pred_region
        _
      $region28: #{prediction_generation_forward.1} parent=11 // pred_fallthru
        _
      // Predicated region
      $region29: #{prediction_generation_forward.1} parent=11 // pred_check
        %p218 = pneg %p144
      $region30: #{prediction_generation_forward.1} parent=11 // pred_check_branch
        %220 = sbr.rel (%p218) target = $region32
      $region31: #{prediction_generation_forward.1} parent=11 // pred_region
        _
      $region32: #{prediction_generation_forward.1} parent=11 // pred_fallthru
        _
      // Predicated region
      $region33: #{prediction_generation_forward.1} parent=11 // pred_check
        %p221 = pneg %p165
      $region34: #{prediction_generation_forward.1} parent=11 // pred_check_branch
        %223 = sbr.rel (%p221) target = $region36
      $region35: #{prediction_generation_forward.1} parent=11 // pred_region
        _
      $region36: #{prediction_generation_forward.1} parent=11 // pred_fallthru
        _
    $region12: #{prediction_generation_forward.1} parent=5 // pred_fallthru
      _
    %p224 = scmp.lt.s32.totalorder %s13, 2
    // Predicated region
    $region37: #{prediction_generation_forward.1} parent=5 // pred_check
      %p225 = pneg %p224
    $region38: #{prediction_generation_forward.1} parent=5 // pred_check_branch
      %227 = sbr.rel (%p225) target = $region40
    $region39: #{prediction_generation_forward.1} parent=5 // pred_region
      // Predicated region
      $region41: #{prediction_generation_forward.1} parent=39 // pred_check
        %p228 = pneg %p33
      $region42: #{prediction_generation_forward.1} parent=39 // pred_check_branch
        %230 = sbr.rel (%p228) target = $region44
      $region43: #{prediction_generation_forward.1} parent=39 // pred_region
        %p231 = scmp.lt.s32.totalorder %s13, 1
        %s232 = scalar_select %p231, %s13, 1
        %s233 = smul.addr %s232, 16
        %s234 = smul.addr %s233, 8
        %s235 = scalar_lea.vmem %s0, %s234
      $region44: #{prediction_generation_forward.1} parent=39 // pred_fallthru
        _
    $region40: #{prediction_generation_forward.1} parent=5 // pred_fallthru
      _
    %p236 = scmp.le.s32.totalorder 1, %s13
    %p237 = scmp.lt.s32.totalorder %s13, 3
    %p238 = pnand %p236, %p237
    %p239 = pneg %p238
    // Predicated region
    $region45: #{prediction_generation_forward.1} parent=5 // pred_check
      _
    $region46: #{prediction_generation_forward.1} parent=5 // pred_check_branch
      %241 = sbr.rel (%p238) target = $region48
    $region47: #{prediction_generation_forward.1} parent=5 // pred_region
      %s242 = ssub.s32 %s13, 1
      %p243 = scmp.lt.s32.totalorder %s18, 1
      %s244 = scalar_select %p243, %s18, 1
      %s245 = smul.addr %s244, 16
      %s246 = smul.addr %s245, 8
      %s247 = scalar_lea.vmem %s0, %s246
      %p248 = pneg %p39
      %p249 = pneg %p36
      %p250 = pneg %p60
      %p251 = pneg %p57
      %p252 = pneg %p81
      %p253 = pneg %p78
      %p254 = pneg %p102
      %p255 = pneg %p99
      %p256 = pneg %p123
      %p257 = pneg %p120
      %p258 = pneg %p144
      %p259 = pneg %p141
      %p260 = pneg %p165
      %p261 = pneg %p162
      %p262 = pneg %p191
      %p263 = pneg %p188
      %p264 = scmp.lt.s32.totalorder %s18, 1
      %s265 = scalar_select %p264, %s18, 1
      %s266 = smul.addr %s265, 4
      %s267 = smul.addr %s266, 8
      %s268 = scalar_lea.vmem %s7, %s267
      %p269 = scmp.lt.s32.totalorder %s18, 1
      %s270 = scalar_select %p269, %s18, 1
      %s271 = smul.addr %s270, 16
      %s272 = smul.addr %s271, 8
      %s273 = scalar_lea.vmem %s0, %s272
      %p274 = scmp.lt.s32.totalorder %s18, 1
      %s275 = scalar_select %p274, %s18, 1
      %s276 = smul.addr %s275, 4
      %s277 = smul.addr %s276, 8
      %s278 = scalar_lea.vmem %s7, %s277
      %v279 = vlaneseq
      %v280 = vand.u32 %v279, 127
      %v281 = vadd.s32 %v280, 128
      %v282 = vld [vmem:[%s1] sm:$0xff]
      %v283 = vld [vmem:[%s1 + $0x8] sm:$0xff]
      %v284 = vld [vmem:[%s1 + $0x10] sm:$0xff]
      %v285 = vld [vmem:[%s1 + $0x18] sm:$0xff]
      %v286 = vld [vmem:[%s273] sm:$0xff]
      %v287 = vld [vmem:[%s273 + $0x8] sm:$0xff]
      %v288 = vld [vmem:[%s273 + $0x10] sm:$0xff]
      %v289 = vld [vmem:[%s273 + $0x18] sm:$0xff]
      %v290 = vld [vmem:[%s273 + $0x20] sm:$0xff]
      %v291 = vld [vmem:[%s273 + $0x28] sm:$0xff]
      %v292 = vld [vmem:[%s273 + $0x30] sm:$0xff]
      %v293 = vld [vmem:[%s273 + $0x38] sm:$0xff]
      %v294 = vld [vmem:[%s273 + $0x40] sm:$0xff]
      %v295 = vld [vmem:[%s273 + $0x48] sm:$0xff]
      %v296 = vld [vmem:[%s273 + $0x50] sm:$0xff]
      %v297 = vld [vmem:[%s273 + $0x58] sm:$0xff]
      %v298 = vld [vmem:[%s273 + $0x60] sm:$0xff]
      %v299 = vld [vmem:[%s273 + $0x68] sm:$0xff]
      %v300 = vld [vmem:[%s273 + $0x70] sm:$0xff]
      %v301 = vld [vmem:[%s273 + $0x78] sm:$0xff]
      %v302 = vld [vmem:[%s2] sm:$0xff]
      %v303 = vld [vmem:[%s2 + $0x8] sm:$0xff]
      %v304 = vld [vmem:[%s2 + $0x10] sm:$0xff]
      %v305 = vld [vmem:[%s2 + $0x18] sm:$0xff]
      %307 = vset.pattern.permute.xlu0 0
      %308 = vperm.xlu0 %307, %v302
      %v309 = vpop.permute.xlu0 %308
      %312 = vset.pattern.permute.xlu0 0
      %313 = vperm.xlu0 %312, %v303
      %v314 = vpop.permute.xlu0 %313
      %317 = vset.pattern.permute.xlu0 0
      %318 = vperm.xlu0 %317, %v304
      %v319 = vpop.permute.xlu0 %318
      %322 = vset.pattern.permute.xlu0 0
      %323 = vperm.xlu0 %322, %v305
      %v324 = vpop.permute.xlu0 %323
      %vm326 = vcmask 523264
      %v328 = vsel %vm326, %v282, 0
      %v331 = vsel %vm326, %v283, 0
      %v334 = vsel %vm326, %v284, 0
      %v337 = vsel %vm326, %v285, 0
      %339 = vmatprep.subr.mxu0 %v287
      %340 = vmatpush1.msra.mxu0 %v286
      %341 = vmatprep.subr.mxu0 %v289
      %342 = vmatpush1.msra.mxu0 %v288
      %343 = vmatprep.subr.mxu0 %v291
      %344 = vmatpush1.msra.mxu0 %v290
      %345 = vmatprep.subr.mxu0 %v293
      %346 = vmatpush1.msra.mxu0 %v292
      %347 = vmatprep.subr.mxu0 %v295
      %348 = vmatpush1.msra.mxu0 %v294
      %349 = vmatprep.subr.mxu0 %v297
      %350 = vmatpush1.msra.mxu0 %v296
      %351 = vmatprep.subr.mxu0 %v299
      %352 = vmatpush1.msra.mxu0 %v298
      %353 = vmatprep.subr.mxu0 %v301
      %354 = vmatpush1.msra.mxu0 %v300
      %355 = vmatprep.subr.mxu0 0.0
      %356 = vmatpush1.msra.mxu0 0.0
      %357 = vmatprep.subr.mxu0 0.0
      %358 = vmatpush1.msra.mxu0 0.0
      %359 = vmatprep.subr.mxu0 0.0
      %360 = vmatpush1.msra.mxu0 0.0
      %361 = vmatprep.subr.mxu0 0.0
      %362 = vmatpush1.msra.mxu0 0.0
      %363 = vmatprep.subr.mxu0 0.0
      %364 = vmatpush1.msra.mxu0 0.0
      %365 = vmatprep.subr.mxu0 0.0
      %366 = vmatpush1.msra.mxu0 0.0
      %367 = vmatprep.subr.mxu0 0.0
      %368 = vmatpush1.msra.mxu0 0.0
      %369 = vmatprep.subr.mxu0 0.0
      %370 = vmatpush1.msra.mxu0 0.0
      %371 = vmatprep.subr.mxu0 0.0
      %372 = vmatpush1.msra.mxu0 0.0
      %373 = vmatprep.subr.mxu0 0.0
      %374 = vmatpush1.msra.mxu0 0.0
      %375 = vmatprep.subr.mxu0 0.0
      %376 = vmatpush1.msra.mxu0 0.0
      %377 = vmatprep.subr.mxu0 0.0
      %378 = vmatpush1.msra.mxu0 0.0
      %379 = vmatprep.subr.mxu0 0.0
      %380 = vmatpush1.msra.mxu0 0.0
      %381 = vmatprep.subr.mxu0 0.0
      %382 = vmatpush1.msra.mxu0 0.0
      %383 = vmatprep.subr.mxu0 0.0
      %384 = vmatpush1.msra.mxu0 0.0
      %385 = vmatprep.subr.mxu0 0.0
      %386 = vmatpush1.msra.mxu0 0.0
      %387 = vmatprep.subr.mxu0 0.0
      %388 = vmatpush1.msra.mxu0 0.0
      %389 = vmatprep.subr.mxu0 0.0
      %390 = vmatpush1.msra.mxu0 0.0
      %391 = vmatprep.subr.mxu0 0.0
      %392 = vmatpush1.msra.mxu0 0.0
      %393 = vmatprep.subr.mxu0 0.0
      %394 = vmatpush1.msra.mxu0 0.0
      %395 = vmatprep.subr.mxu0 0.0
      %396 = vmatpush1.msra.mxu0 0.0
      %397 = vmatprep.subr.mxu0 0.0
      %398 = vmatpush1.msra.mxu0 0.0
      %399 = vmatprep.subr.mxu0 0.0
      %400 = vmatpush1.msra.mxu0 0.0
      %401 = vmatprep.subr.mxu0 0.0
      %402 = vmatpush1.msra.mxu0 0.0
      %403 = vmatprep.mubr.f32.mxu0 0.0
      %404 = vmatmul.mubr.f32.gmra.mrb[0].mxu0 %v328
      %v405 = vpop.f32.mrb[0].mxu0
      %v406 = vadd.f32 %v309, %v405
      %v407 = vpop.f32.mrb[0].mxu0
      %v408 = vadd.f32 %v309, %v407
      %409 = vmatprep.mubr.f32.mxu0 0.0
      %410 = vmatmul.mubr.f32.gmra.mrb[0].mxu0 %v331
      %v411 = vpop.f32.mrb[0].mxu0
      %v412 = vadd.f32 %v314, %v411
      %v413 = vpop.f32.mrb[0].mxu0
      %v414 = vadd.f32 %v314, %v413
      %415 = vmatprep.mubr.f32.mxu0 0.0
      %416 = vmatmul.mubr.f32.gmra.mrb[0].mxu0 %v334
      %v417 = vpop.f32.mrb[0].mxu0
      %v418 = vadd.f32 %v319, %v417
      %v419 = vpop.f32.mrb[0].mxu0
      %v420 = vadd.f32 %v319, %v419
      %421 = vmatprep.mubr.f32.mxu0 0.0
      %422 = vmatmul.mubr.f32.gmra.mrb[0].mxu0 %v337
      %v423 = vpop.f32.mrb[0].mxu0
      %v424 = vadd.f32 %v324, %v423
      %v425 = vpop.f32.mrb[0].mxu0
      %v426 = vadd.f32 %v324, %v425
      %427 = vdwg.mxu0
      %428 = vst [vmem:[#allocation2] sm:$0xff] %v406
      %429 = vst [vmem:[#allocation2 + $0x8] sm:$0xff] %v408
      %430 = vst [vmem:[#allocation2 + $0x10] sm:$0xff] %v412
      %431 = vst [vmem:[#allocation2 + $0x18] sm:$0xff] %v414
      %432 = vst [vmem:[#allocation2 + $0x20] sm:$0xff] %v418
      %433 = vst [vmem:[#allocation2 + $0x28] sm:$0xff] %v420
      %434 = vst [vmem:[#allocation2 + $0x30] sm:$0xff] %v424
      %435 = vst [vmem:[#allocation2 + $0x38] sm:$0xff] %v426
      %v436 = vld [vmem:[#allocation2] sm:$0xff]
      %v437 = vld [vmem:[#allocation2 + $0x8] sm:$0xff]
      %v438 = vld [vmem:[#allocation2 + $0x10] sm:$0xff]
      %v439 = vld [vmem:[#allocation2 + $0x18] sm:$0xff]
      %v440 = vld [vmem:[#allocation2 + $0x20] sm:$0xff]
      %v441 = vld [vmem:[#allocation2 + $0x28] sm:$0xff]
      %v442 = vld [vmem:[#allocation2 + $0x30] sm:$0xff]
      %v443 = vld [vmem:[#allocation2 + $0x38] sm:$0xff]
      %444 = vst [vmem:[#allocation3] sm:$0xff] %v436
      %445 = vst [vmem:[#allocation3 + $0x8] sm:$0xff] %v437
      %446 = vst [vmem:[#allocation3 + $0x10] sm:$0xff] %v438
      %447 = vst [vmem:[#allocation3 + $0x18] sm:$0xff] %v439
      %448 = vst [vmem:[#allocation3 + $0x20] sm:$0xff] %v440
      %449 = vst [vmem:[#allocation3 + $0x28] sm:$0xff] %v441
      %450 = vst [vmem:[#allocation3 + $0x30] sm:$0xff] %v442
      %451 = vst [vmem:[#allocation3 + $0x38] sm:$0xff] %v443
      %vm452 = vcmp.ge.s32.totalorder %v280, 8
      %vm453 = vcmp.ge.s32.totalorder %v281, 8
      %454 = vrot.lane.b32.xlu0 %v436, 8
      %v455 = vpop.permute.xlu0 %454
      %456 = vrot.lane.b32.xlu0 %v438, 8
      %v457 = vpop.permute.xlu0 %456
      %458 = vrot.lane.b32.xlu0 %v440, 8
      %v459 = vpop.permute.xlu0 %458
      %460 = vrot.lane.b32.xlu0 %v442, 8
      %v461 = vpop.permute.xlu0 %460
      %462 = vrot.lane.b32.xlu0 %v437, 8
      %v463 = vpop.permute.xlu0 %462
      %464 = vrot.lane.b32.xlu0 %v439, 8
      %v465 = vpop.permute.xlu0 %464
      %466 = vrot.lane.b32.xlu0 %v441, 8
      %v467 = vpop.permute.xlu0 %466
      %468 = vrot.lane.b32.xlu0 %v443, 8
      %v469 = vpop.permute.xlu0 %468
      %vm470 = vcmp.lt.s32.totalorder %v280, 8
      %v471 = vsel %vm470, %v455, %v463
      %v472 = vsel %vm470, %v457, %v465
      %v473 = vsel %vm470, %v459, %v467
      %v474 = vsel %vm470, %v461, %v469
      %v475 = vsel %vm470, %v463, %v455
      %v476 = vsel %vm470, %v465, %v457
      %v477 = vsel %vm470, %v467, %v459
      %v478 = vsel %vm470, %v469, %v461
      %v479 = vsel %vm452, %v475, 0.0
      %v480 = vsel %vm453, %v471, 0.0
      %v481 = vsel %vm452, %v476, 0.0
      %v482 = vsel %vm453, %v472, 0.0
      %v483 = vsel %vm452, %v477, 0.0
      %v484 = vsel %vm453, %v473, 0.0
      %v485 = vsel %vm452, %v478, 0.0
      %v486 = vsel %vm453, %v474, 0.0
      %487 = vst [vmem:[#allocation3 + $0x40] sm:$0xff] %v479
      %488 = vst [vmem:[#allocation3 + $0x48] sm:$0xff] %v480
      %489 = vst [vmem:[#allocation3 + $0x50] sm:$0xff] %v481
      %490 = vst [vmem:[#allocation3 + $0x58] sm:$0xff] %v482
      %491 = vst [vmem:[#allocation3 + $0x60] sm:$0xff] %v483
      %492 = vst [vmem:[#allocation3 + $0x68] sm:$0xff] %v484
      %493 = vst [vmem:[#allocation3 + $0x70] sm:$0xff] %v485
      %494 = vst [vmem:[#allocation3 + $0x78] sm:$0xff] %v486
      %vm495 = vcmp.lt.s32.totalorder %v280, 192
      %vm496 = vcmp.lt.s32.totalorder %v281, 192
      %497 = vrot.lane.b32.xlu0 %v436, 120
      %v498 = vpop.permute.xlu0 %497
      %499 = vrot.lane.b32.xlu0 %v438, 120
      %v500 = vpop.permute.xlu0 %499
      %501 = vrot.lane.b32.xlu0 %v440, 120
      %v502 = vpop.permute.xlu0 %501
      %503 = vrot.lane.b32.xlu0 %v442, 120
      %v504 = vpop.permute.xlu0 %503
      %505 = vrot.lane.b32.xlu0 %v437, 120
      %v506 = vpop.permute.xlu0 %505
      %507 = vrot.lane.b32.xlu0 %v439, 120
      %v508 = vpop.permute.xlu0 %507
      %509 = vrot.lane.b32.xlu0 %v441, 120
      %v510 = vpop.permute.xlu0 %509
      %511 = vrot.lane.b32.xlu0 %v443, 120
      %v512 = vpop.permute.xlu0 %511
      %vm513 = vcmp.lt.s32.totalorder %v280, 120
      %v514 = vsel %vm513, %v498, %v506
      %v515 = vsel %vm513, %v500, %v508
      %v516 = vsel %vm513, %v502, %v510
      %v517 = vsel %vm513, %v504, %v512
      %v518 = vsel %vm513, %v506, %v498
      %v519 = vsel %vm513, %v508, %v500
      %v520 = vsel %vm513, %v510, %v502
      %v521 = vsel %vm513, %v512, %v504
      %v522 = vsel %vm495, %v514, 0.0
      %v523 = vsel %vm496, %v518, 0.0
      %v524 = vsel %vm495, %v515, 0.0
      %v525 = vsel %vm496, %v519, 0.0
      %v526 = vsel %vm495, %v516, 0.0
      %v527 = vsel %vm496, %v520, 0.0
      %v528 = vsel %vm495, %v517, 0.0
      %v529 = vsel %vm496, %v521, 0.0
      %530 = vst [vmem:[#allocation3 + $0x80] sm:$0xff] %v522
      %531 = vst [vmem:[#allocation3 + $0x88] sm:$0xff] %v523
      %532 = vst [vmem:[#allocation3 + $0x90] sm:$0xff] %v524
      %533 = vst [vmem:[#allocation3 + $0x98] sm:$0xff] %v525
      %534 = vst [vmem:[#allocation3 + $0xa0] sm:$0xff] %v526
      %535 = vst [vmem:[#allocation3 + $0xa8] sm:$0xff] %v527
      %536 = vst [vmem:[#allocation3 + $0xb0] sm:$0xff] %v528
      %537 = vst [vmem:[#allocation3 + $0xb8] sm:$0xff] %v529
      %vm538 = vcmp.ge.s32.totalorder %v280, 1
      %vm539 = vcmp.ge.s32.totalorder %v281, 1
      %540 = vrot.lane.b32.xlu0 %v436, 1
      %v541 = vpop.permute.xlu0 %540
      %542 = vrot.lane.b32.xlu0 %v438, 1
      %v543 = vpop.permute.xlu0 %542
      %544 = vrot.lane.b32.xlu0 %v440, 1
      %v545 = vpop.permute.xlu0 %544
      %546 = vrot.lane.b32.xlu0 %v442, 1
      %v547 = vpop.permute.xlu0 %546
      %548 = vrot.lane.b32.xlu0 %v437, 1
      %v549 = vpop.permute.xlu0 %548
      %550 = vrot.lane.b32.xlu0 %v439, 1
      %v551 = vpop.permute.xlu0 %550
      %552 = vrot.lane.b32.xlu0 %v441, 1
      %v553 = vpop.permute.xlu0 %552
      %554 = vrot.lane.b32.xlu0 %v443, 1
      %v555 = vpop.permute.xlu0 %554
      %vm556 = vcmp.lt.s32.totalorder %v280, 1
      %v557 = vsel %vm556, %v541, %v549
      %v558 = vsel %vm556, %v543, %v551
      %v559 = vsel %vm556, %v545, %v553
      %v560 = vsel %vm556, %v547, %v555
      %v561 = vsel %vm556, %v549, %v541
      %v562 = vsel %vm556, %v551, %v543
      %v563 = vsel %vm556, %v553, %v545
      %v564 = vsel %vm556, %v555, %v547
      %v565 = vsel %vm538, %v561, 0.0
      %v566 = vsel %vm539, %v557, 0.0
      %v567 = vsel %vm538, %v562, 0.0
      %v568 = vsel %vm539, %v558, 0.0
      %v569 = vsel %vm538, %v563, 0.0
      %v570 = vsel %vm539, %v559, 0.0
      %v571 = vsel %vm538, %v564, 0.0
      %v572 = vsel %vm539, %v560, 0.0
      %573 = vst [vmem:[#allocation3 + $0xc0] sm:$0xff] %v565
      %574 = vst [vmem:[#allocation3 + $0xc8] sm:$0xff] %v566
      %575 = vst [vmem:[#allocation3 + $0xd0] sm:$0xff] %v567
      %576 = vst [vmem:[#allocation3 + $0xd8] sm:$0xff] %v568
      %577 = vst [vmem:[#allocation3 + $0xe0] sm:$0xff] %v569
      %578 = vst [vmem:[#allocation3 + $0xe8] sm:$0xff] %v570
      %579 = vst [vmem:[#allocation3 + $0xf0] sm:$0xff] %v571
      %580 = vst [vmem:[#allocation3 + $0xf8] sm:$0xff] %v572
      %vm581 = vcmp.lt.s32.totalorder %v280, 199
      %vm582 = vcmp.lt.s32.totalorder %v281, 199
      %583 = vrot.lane.b32.xlu0 %v436, 127
      %v584 = vpop.permute.xlu0 %583
      %585 = vrot.lane.b32.xlu0 %v438, 127
      %v586 = vpop.permute.xlu0 %585
      %587 = vrot.lane.b32.xlu0 %v440, 127
      %v588 = vpop.permute.xlu0 %587
      %589 = vrot.lane.b32.xlu0 %v442, 127
      %v590 = vpop.permute.xlu0 %589
      %591 = vrot.lane.b32.xlu0 %v437, 127
      %v592 = vpop.permute.xlu0 %591
      %593 = vrot.lane.b32.xlu0 %v439, 127
      %v594 = vpop.permute.xlu0 %593
      %595 = vrot.lane.b32.xlu0 %v441, 127
      %v596 = vpop.permute.xlu0 %595
      %597 = vrot.lane.b32.xlu0 %v443, 127
      %v598 = vpop.permute.xlu0 %597
      %vm599 = vcmp.lt.s32.totalorder %v280, 127
      %v600 = vsel %vm599, %v584, %v592
      %v601 = vsel %vm599, %v586, %v594
      %v602 = vsel %vm599, %v588, %v596
      %v603 = vsel %vm599, %v590, %v598
      %v604 = vsel %vm599, %v592, %v584
      %v605 = vsel %vm599, %v594, %v586
      %v606 = vsel %vm599, %v596, %v588
      %v607 = vsel %vm599, %v598, %v590
      %v608 = vsel %vm581, %v600, 0.0
      %v609 = vsel %vm582, %v604, 0.0
      %v610 = vsel %vm581, %v601, 0.0
      %v611 = vsel %vm582, %v605, 0.0
      %v612 = vsel %vm581, %v602, 0.0
      %v613 = vsel %vm582, %v606, 0.0
      %v614 = vsel %vm581, %v603, 0.0
      %v615 = vsel %vm582, %v607, 0.0
      %616 = vst [vmem:[#allocation3 + $0x100] sm:$0xff] %v608
      %617 = vst [vmem:[#allocation3 + $0x108] sm:$0xff] %v609
      %618 = vst [vmem:[#allocation3 + $0x110] sm:$0xff] %v610
      %619 = vst [vmem:[#allocation3 + $0x118] sm:$0xff] %v611
      %620 = vst [vmem:[#allocation3 + $0x120] sm:$0xff] %v612
      %621 = vst [vmem:[#allocation3 + $0x128] sm:$0xff] %v613
      %622 = vst [vmem:[#allocation3 + $0x130] sm:$0xff] %v614
      %623 = vst [vmem:[#allocation3 + $0x138] sm:$0xff] %v615
      %v624 = vld [vmem:[%s3] sm:$0xff]
      %v625 = vld [vmem:[%s3 + $0x8] sm:$0xff]
      %v626 = vld [vmem:[%s3 + $0x10] sm:$0xff]
      %v627 = vld [vmem:[%s3 + $0x18] sm:$0xff]
      %v628 = vld [vmem:[%s3 + $0x20] sm:$0xff]
      %v629 = vld [vmem:[%s3 + $0x28] sm:$0xff]
      %v630 = vld [vmem:[%s3 + $0x30] sm:$0xff]
      %v631 = vld [vmem:[%s3 + $0x38] sm:$0xff]
      %v632 = vld [vmem:[#allocation3] sm:$0xff]
      %v633 = vld [vmem:[#allocation3 + $0x8] sm:$0xff]
      %v634 = vld [vmem:[#allocation3 + $0x10] sm:$0xff]
      %v635 = vld [vmem:[#allocation3 + $0x18] sm:$0xff]
      %v636 = vld [vmem:[#allocation3 + $0x20] sm:$0xff]
      %v637 = vld [vmem:[#allocation3 + $0x28] sm:$0xff]
      %v638 = vld [vmem:[#allocation3 + $0x30] sm:$0xff]
      %v639 = vld [vmem:[#allocation3 + $0x38] sm:$0xff]
      %v640 = vld [vmem:[#allocation3 + $0x40] sm:$0xff]
      %v641 = vld [vmem:[#allocation3 + $0x48] sm:$0xff]
      %v642 = vld [vmem:[#allocation3 + $0x50] sm:$0xff]
      %v643 = vld [vmem:[#allocation3 + $0x58] sm:$0xff]
      %v644 = vld [vmem:[#allocation3 + $0x60] sm:$0xff]
      %v645 = vld [vmem:[#allocation3 + $0x68] sm:$0xff]
      %v646 = vld [vmem:[#allocation3 + $0x70] sm:$0xff]
      %v647 = vld [vmem:[#allocation3 + $0x78] sm:$0xff]
      %v648 = vld [vmem:[#allocation3 + $0x80] sm:$0xff]
      %v649 = vld [vmem:[#allocation3 + $0x88] sm:$0xff]
      %v650 = vld [vmem:[#allocation3 + $0x90] sm:$0xff]
      %v651 = vld [vmem:[#allocation3 + $0x98] sm:$0xff]
      %v652 = vld [vmem:[#allocation3 + $0xa0] sm:$0xff]
      %v653 = vld [vmem:[#allocation3 + $0xa8] sm:$0xff]
      %v654 = vld [vmem:[#allocation3 + $0xb0] sm:$0xff]
      %v655 = vld [vmem:[#allocation3 + $0xb8] sm:$0xff]
      %v656 = vld [vmem:[#allocation3 + $0xc0] sm:$0xff]
      %v657 = vld [vmem:[#allocation3 + $0xc8] sm:$0xff]
      %v658 = vld [vmem:[#allocation3 + $0xd0] sm:$0xff]
      %v659 = vld [vmem:[#allocation3 + $0xd8] sm:$0xff]
      %v660 = vld [vmem:[#allocation3 + $0xe0] sm:$0xff]
      %v661 = vld [vmem:[#allocation3 + $0xe8] sm:$0xff]
      %v662 = vld [vmem:[#allocation3 + $0xf0] sm:$0xff]
      %v663 = vld [vmem:[#allocation3 + $0xf8] sm:$0xff]
      %v664 = vld [vmem:[#allocation3 + $0x100] sm:$0xff]
      %v665 = vld [vmem:[#allocation3 + $0x108] sm:$0xff]
      %v666 = vld [vmem:[#allocation3 + $0x110] sm:$0xff]
      %v667 = vld [vmem:[#allocation3 + $0x118] sm:$0xff]
      %v668 = vld [vmem:[#allocation3 + $0x120] sm:$0xff]
      %v669 = vld [vmem:[#allocation3 + $0x128] sm:$0xff]
      %v670 = vld [vmem:[#allocation3 + $0x130] sm:$0xff]
      %v671 = vld [vmem:[#allocation3 + $0x138] sm:$0xff]
      %v672 = vld [vmem:[%s4] sm:$0xff]
      %v673 = vld [vmem:[%s4 + $0x8] sm:$0xff]
      %v674 = vld [vmem:[%s4 + $0x10] sm:$0xff]
      %v675 = vld [vmem:[%s4 + $0x18] sm:$0xff]
      %677 = vset.pattern.permute.xlu0 0
      %678 = vperm.xlu0 %677, %v672
      %v679 = vpop.permute.xlu0 %678
      %682 = vset.pattern.permute.xlu0 0
      %683 = vperm.xlu0 %682, %v673
      %v684 = vpop.permute.xlu0 %683
      %687 = vset.pattern.permute.xlu0 0
      %688 = vperm.xlu0 %687, %v674
      %v689 = vpop.permute.xlu0 %688
      %692 = vset.pattern.permute.xlu0 0
      %693 = vperm.xlu0 %692, %v675
      %v694 = vpop.permute.xlu0 %693
      %vm696 = vcmask 261120
      %v698 = vsel %vm696, %v625, 0
      %v701 = vsel %vm696, %v627, 0
      %v704 = vsel %vm696, %v629, 0
      %v707 = vsel %vm696, %v631, 0
      %709 = vmatprep.subr.mxu0 %v633
      %710 = vmatpush1.msra.mxu0 %v632
      %711 = vmatprep.subr.mxu0 %v635
      %712 = vmatpush1.msra.mxu0 %v634
      %713 = vmatprep.subr.mxu0 %v637
      %714 = vmatpush1.msra.mxu0 %v636
      %715 = vmatprep.subr.mxu0 %v639
      %716 = vmatpush1.msra.mxu0 %v638
      %717 = vmatprep.subr.mxu0 %v641
      %718 = vmatpush1.msra.mxu0 %v640
      %719 = vmatprep.subr.mxu0 %v643
      %720 = vmatpush1.msra.mxu0 %v642
      %721 = vmatprep.subr.mxu0 %v645
      %722 = vmatpush1.msra.mxu0 %v644
      %723 = vmatprep.subr.mxu0 %v647
      %724 = vmatpush1.msra.mxu0 %v646
      %725 = vmatprep.subr.mxu0 %v649
      %726 = vmatpush1.msra.mxu0 %v648
      %727 = vmatprep.subr.mxu0 %v651
      %728 = vmatpush1.msra.mxu0 %v650
      %729 = vmatprep.subr.mxu0 %v653
      %730 = vmatpush1.msra.mxu0 %v652
      %731 = vmatprep.subr.mxu0 %v655
      %732 = vmatpush1.msra.mxu0 %v654
      %733 = vmatprep.subr.mxu0 %v657
      %734 = vmatpush1.msra.mxu0 %v656
      %735 = vmatprep.subr.mxu0 %v659
      %736 = vmatpush1.msra.mxu0 %v658
      %737 = vmatprep.subr.mxu0 %v661
      %738 = vmatpush1.msra.mxu0 %v660
      %739 = vmatprep.subr.mxu0 %v663
      %740 = vmatpush1.msra.mxu0 %v662
      %741 = vmatprep.subr.mxu0 %v665
      %742 = vmatpush1.msra.mxu0 %v664
      %743 = vmatprep.subr.mxu0 %v667
      %744 = vmatpush1.msra.mxu0 %v666
      %745 = vmatprep.subr.mxu0 %v669
      %746 = vmatpush1.msra.mxu0 %v668
      %747 = vmatprep.subr.mxu0 %v671
      %748 = vmatpush1.msra.mxu0 %v670
      %749 = vmatprep.subr.mxu0 0.0
      %750 = vmatpush1.msra.mxu0 0.0
      %751 = vmatprep.subr.mxu0 0.0
      %752 = vmatpush1.msra.mxu0 0.0
      %753 = vmatprep.subr.mxu0 0.0
      %754 = vmatpush1.msra.mxu0 0.0
      %755 = vmatprep.subr.mxu0 0.0
      %756 = vmatpush1.msra.mxu0 0.0
      %757 = vmatprep.subr.mxu0 0.0
      %758 = vmatpush1.msra.mxu0 0.0
      %759 = vmatprep.subr.mxu0 0.0
      %760 = vmatpush1.msra.mxu0 0.0
      %761 = vmatprep.subr.mxu0 0.0
      %762 = vmatpush1.msra.mxu0 0.0
      %763 = vmatprep.subr.mxu0 0.0
      %764 = vmatpush1.msra.mxu0 0.0
      %765 = vmatprep.subr.mxu0 0.0
      %766 = vmatpush1.msra.mxu0 0.0
      %767 = vmatprep.subr.mxu0 0.0
      %768 = vmatpush1.msra.mxu0 0.0
      %769 = vmatprep.subr.mxu0 0.0
      %770 = vmatpush1.msra.mxu0 0.0
      %771 = vmatprep.subr.mxu0 0.0
      %772 = vmatpush1.msra.mxu0 0.0
      %773 = vmatprep.mubr.f32.mxu0 %v698
      %774 = vmatmul.mubr.f32.gmra.mrb[0].mxu0 %v624
      %v775 = vpop.f32.mrb[0].mxu0
      %v776 = vadd.f32 %v679, %v775
      %v777 = vpop.f32.mrb[0].mxu0
      %v778 = vadd.f32 %v679, %v777
      %779 = vmatprep.mubr.f32.mxu0 %v701
      %780 = vmatmul.mubr.f32.gmra.mrb[0].mxu0 %v626
      %v781 = vpop.f32.mrb[0].mxu0
      %v782 = vadd.f32 %v684, %v781
      %v783 = vpop.f32.mrb[0].mxu0
      %v784 = vadd.f32 %v684, %v783
      %785 = vmatprep.mubr.f32.mxu0 %v704
      %786 = vmatmul.mubr.f32.gmra.mrb[0].mxu0 %v628
      %v787 = vpop.f32.mrb[0].mxu0
      %v788 = vadd.f32 %v689, %v787
      %v789 = vpop.f32.mrb[0].mxu0
      %v790 = vadd.f32 %v689, %v789
      %791 = vmatprep.mubr.f32.mxu0 %v707
      %792 = vmatmul.mubr.f32.gmra.mrb[0].mxu0 %v630
      %v793 = vpop.f32.mrb[0].mxu0
      %v794 = vadd.f32 %v694, %v793
      %v795 = vpop.f32.mrb[0].mxu0
      %v796 = vadd.f32 %v694, %v795
      %797 = vdwg.mxu0
      %v798 = vmax.f32 %v776, 0.0
      %v799 = vmax.f32 %v778, 0.0
      %v800 = vmax.f32 %v782, 0.0
      %v801 = vmax.f32 %v784, 0.0
      %v802 = vmax.f32 %v788, 0.0
      %v803 = vmax.f32 %v790, 0.0
      %v804 = vmax.f32 %v794, 0.0
      %v805 = vmax.f32 %v796, 0.0
      %v806 = vadd.f32 %v798, %v436
      %v807 = vadd.f32 %v799, %v437
      %v808 = vadd.f32 %v800, %v438
      %v809 = vadd.f32 %v801, %v439
      %v810 = vadd.f32 %v802, %v440
      %v811 = vadd.f32 %v803, %v441
      %v812 = vadd.f32 %v804, %v442
      %v813 = vadd.f32 %v805, %v443
      %814 = vst [vmem:[#allocation2] sm:$0xff] %v806
      %815 = vst [vmem:[#allocation2 + $0x8] sm:$0xff] %v807
      %816 = vst [vmem:[#allocation2 + $0x10] sm:$0xff] %v808
      %817 = vst [vmem:[#allocation2 + $0x18] sm:$0xff] %v809
      %818 = vst [vmem:[#allocation2 + $0x20] sm:$0xff] %v810
      %819 = vst [vmem:[#allocation2 + $0x28] sm:$0xff] %v811
      %820 = vst [vmem:[#allocation2 + $0x30] sm:$0xff] %v812
      %821 = vst [vmem:[#allocation2 + $0x38] sm:$0xff] %v813
      %v822 = vld [vmem:[#allocation2] sm:$0xff]
      %v823 = vld [vmem:[#allocation2 + $0x8] sm:$0xff]
      %v824 = vld [vmem:[#allocation2 + $0x10] sm:$0xff]
      %v825 = vld [vmem:[#allocation2 + $0x18] sm:$0xff]
      %v826 = vld [vmem:[#allocation2 + $0x20] sm:$0xff]
      %v827 = vld [vmem:[#allocation2 + $0x28] sm:$0xff]
      %v828 = vld [vmem:[#allocation2 + $0x30] sm:$0xff]
      %v829 = vld [vmem:[#allocation2 + $0x38] sm:$0xff]
      %830 = vst [vmem:[#allocation3] sm:$0xff] %v822
      %831 = vst [vmem:[#allocation3 + $0x8] sm:$0xff] %v823
      %832 = vst [vmem:[#allocation3 + $0x10] sm:$0xff] %v824
      %833 = vst [vmem:[#allocation3 + $0x18] sm:$0xff] %v825
      %834 = vst [vmem:[#allocation3 + $0x20] sm:$0xff] %v826
      %835 = vst [vmem:[#allocation3 + $0x28] sm:$0xff] %v827
      %836 = vst [vmem:[#allocation3 + $0x30] sm:$0xff] %v828
      %837 = vst [vmem:[#allocation3 + $0x38] sm:$0xff] %v829
      %vm838 = vcmp.ge.s32.totalorder %v280, 4
      %vm839 = vcmp.ge.s32.totalorder %v281, 4
      %840 = vrot.lane.b32.xlu0 %v822, 4
      %v841 = vpop.permute.xlu0 %840
      %842 = vrot.lane.b32.xlu0 %v824, 4
      %v843 = vpop.permute.xlu0 %842
      %844 = vrot.lane.b32.xlu0 %v826, 4
      %v845 = vpop.permute.xlu0 %844
      %846 = vrot.lane.b32.xlu0 %v828, 4
      %v847 = vpop.permute.xlu0 %846
      %848 = vrot.lane.b32.xlu0 %v823, 4
      %v849 = vpop.permute.xlu0 %848
      %850 = vrot.lane.b32.xlu0 %v825, 4
      %v851 = vpop.permute.xlu0 %850
      %852 = vrot.lane.b32.xlu0 %v827, 4
      %v853 = vpop.permute.xlu0 %852
      %854 = vrot.lane.b32.xlu0 %v829, 4
      %v855 = vpop.permute.xlu0 %854
      %vm856 = vcmp.lt.s32.totalorder %v280, 4
      %v857 = vsel %vm856, %v841, %v849
      %v858 = vsel %vm856, %v843, %v851
      %v859 = vsel %vm856, %v845, %v853
      %v860 = vsel %vm856, %v847, %v855
      %v861 = vsel %vm856, %v849, %v841
      %v862 = vsel %vm856, %v851, %v843
      %v863 = vsel %vm856, %v853, %v845
      %v864 = vsel %vm856, %v855, %v847
      %v865 = vsel %vm838, %v861, 0.0
      %v866 = vsel %vm839, %v857, 0.0
      %v867 = vsel %vm838, %v862, 0.0
      %v868 = vsel %vm839, %v858, 0.0
      %v869 = vsel %vm838, %v863, 0.0
      %v870 = vsel %vm839, %v859, 0.0
      %v871 = vsel %vm838, %v864, 0.0
      %v872 = vsel %vm839, %v860, 0.0
      %873 = vst [vmem:[#allocation3 + $0x40] sm:$0xff] %v865
      %874 = vst [vmem:[#allocation3 + $0x48] sm:$0xff] %v866
      %875 = vst [vmem:[#allocation3 + $0x50] sm:$0xff] %v867
      %876 = vst [vmem:[#allocation3 + $0x58] sm:$0xff] %v868
      %877 = vst [vmem:[#allocation3 + $0x60] sm:$0xff] %v869
      %878 = vst [vmem:[#allocation3 + $0x68] sm:$0xff] %v870
      %879 = vst [vmem:[#allocation3 + $0x70] sm:$0xff] %v871
      %880 = vst [vmem:[#allocation3 + $0x78] sm:$0xff] %v872
      %vm881 = vcmp.lt.s32.totalorder %v280, 196
      %vm882 = vcmp.lt.s32.totalorder %v281, 196
      %883 = vrot.lane.b32.xlu0 %v822, 124
      %v884 = vpop.permute.xlu0 %883
      %885 = vrot.lane.b32.xlu0 %v824, 124
      %v886 = vpop.permute.xlu0 %885
      %887 = vrot.lane.b32.xlu0 %v826, 124
      %v888 = vpop.permute.xlu0 %887
      %889 = vrot.lane.b32.xlu0 %v828, 124
      %v890 = vpop.permute.xlu0 %889
      %891 = vrot.lane.b32.xlu0 %v823, 124
      %v892 = vpop.permute.xlu0 %891
      %893 = vrot.lane.b32.xlu0 %v825, 124
      %v894 = vpop.permute.xlu0 %893
      %895 = vrot.lane.b32.xlu0 %v827, 124
      %v896 = vpop.permute.xlu0 %895
      %897 = vrot.lane.b32.xlu0 %v829, 124
      %v898 = vpop.permute.xlu0 %897
      %vm899 = vcmp.lt.s32.totalorder %v280, 124
      %v900 = vsel %vm899, %v884, %v892
      %v901 = vsel %vm899, %v886, %v894
      %v902 = vsel %vm899, %v888, %v896
      %v903 = vsel %vm899, %v890, %v898
      %v904 = vsel %vm899, %v892, %v884
      %v905 = vsel %vm899, %v894, %v886
      %v906 = vsel %vm899, %v896, %v888
      %v907 = vsel %vm899, %v898, %v890
      %v908 = vsel %vm881, %v900, 0.0
      %v909 = vsel %vm882, %v904, 0.0
      %v910 = vsel %vm881, %v901, 0.0
      %v911 = vsel %vm882, %v905, 0.0
      %v912 = vsel %vm881, %v902, 0.0
      %v913 = vsel %vm882, %v906, 0.0
      %v914 = vsel %vm881, %v903, 0.0
      %v915 = vsel %vm882, %v907, 0.0
      %916 = vst [vmem:[#allocation3 + $0x80] sm:$0xff] %v908
      %917 = vst [vmem:[#allocation3 + $0x88] sm:$0xff] %v909
      %918 = vst [vmem:[#allocation3 + $0x90] sm:$0xff] %v910
      %919 = vst [vmem:[#allocation3 + $0x98] sm:$0xff] %v911
      %920 = vst [vmem:[#allocation3 + $0xa0] sm:$0xff] %v912
      %921 = vst [vmem:[#allocation3 + $0xa8] sm:$0xff] %v913
      %922 = vst [vmem:[#allocation3 + $0xb0] sm:$0xff] %v914
      %923 = vst [vmem:[#allocation3 + $0xb8] sm:$0xff] %v915
      %vm924 = vcmp.ge.s32.totalorder %v280, 2
      %vm925 = vcmp.ge.s32.totalorder %v281, 2
      %926 = vrot.lane.b32.xlu0 %v822, 2
      %v927 = vpop.permute.xlu0 %926
      %928 = vrot.lane.b32.xlu0 %v824, 2
      %v929 = vpop.permute.xlu0 %928
      %930 = vrot.lane.b32.xlu0 %v826, 2
      %v931 = vpop.permute.xlu0 %930
      %932 = vrot.lane.b32.xlu0 %v828, 2
      %v933 = vpop.permute.xlu0 %932
      %934 = vrot.lane.b32.xlu0 %v823, 2
      %v935 = vpop.permute.xlu0 %934
      %936 = vrot.lane.b32.xlu0 %v825, 2
      %v937 = vpop.permute.xlu0 %936
      %938 = vrot.lane.b32.xlu0 %v827, 2
      %v939 = vpop.permute.xlu0 %938
      %940 = vrot.lane.b32.xlu0 %v829, 2
      %v941 = vpop.permute.xlu0 %940
      %vm942 = vcmp.lt.s32.totalorder %v280, 2
      %v943 = vsel %vm942, %v927, %v935
      %v944 = vsel %vm942, %v929, %v937
      %v945 = vsel %vm942, %v931, %v939
      %v946 = vsel %vm942, %v933, %v941
      %v947 = vsel %vm942, %v935, %v927
      %v948 = vsel %vm942, %v937, %v929
      %v949 = vsel %vm942, %v939, %v931
      %v950 = vsel %vm942, %v941, %v933
      %v951 = vsel %vm924, %v947, 0.0
      %v952 = vsel %vm925, %v943, 0.0
      %v953 = vsel %vm924, %v948, 0.0
      %v954 = vsel %vm925, %v944, 0.0
      %v955 = vsel %vm924, %v949, 0.0
      %v956 = vsel %vm925, %v945, 0.0
      %v957 = vsel %vm924, %v950, 0.0
      %v958 = vsel %vm925, %v946, 0.0
      %959 = vst [vmem:[#allocation3 + $0xc0] sm:$0xff] %v951
      %960 = vst [vmem:[#allocation3 + $0xc8] sm:$0xff] %v952
      %961 = vst [vmem:[#allocation3 + $0xd0] sm:$0xff] %v953
      %962 = vst [vmem:[#allocation3 + $0xd8] sm:$0xff] %v954
      %963 = vst [vmem:[#allocation3 + $0xe0] sm:$0xff] %v955
      %964 = vst [vmem:[#allocation3 + $0xe8] sm:$0xff] %v956
      %965 = vst [vmem:[#allocation3 + $0xf0] sm:$0xff] %v957
      %966 = vst [vmem:[#allocation3 + $0xf8] sm:$0xff] %v958
      %vm967 = vcmp.lt.s32.totalorder %v280, 198
      %vm968 = vcmp.lt.s32.totalorder %v281, 198
      %969 = vrot.lane.b32.xlu0 %v822, 126
      %v970 = vpop.permute.xlu0 %969
      %971 = vrot.lane.b32.xlu0 %v824, 126
      %v972 = vpop.permute.xlu0 %971
      %973 = vrot.lane.b32.xlu0 %v826, 126
      %v974 = vpop.permute.xlu0 %973
      %975 = vrot.lane.b32.xlu0 %v828, 126
      %v976 = vpop.permute.xlu0 %975
      %977 = vrot.lane.b32.xlu0 %v823, 126
      %v978 = vpop.permute.xlu0 %977
      %979 = vrot.lane.b32.xlu0 %v825, 126
      %v980 = vpop.permute.xlu0 %979
      %981 = vrot.lane.b32.xlu0 %v827, 126
      %v982 = vpop.permute.xlu0 %981
      %983 = vrot.lane.b32.xlu0 %v829, 126
      %v984 = vpop.permute.xlu0 %983
      %vm985 = vcmp.lt.s32.totalorder %v280, 126
      %v986 = vsel %vm985, %v970, %v978
      %v987 = vsel %vm985, %v972, %v980
      %v988 = vsel %vm985, %v974, %v982
      %v989 = vsel %vm985, %v976, %v984
      %v990 = vsel %vm985, %v978, %v970
      %v991 = vsel %vm985, %v980, %v972
      %v992 = vsel %vm985, %v982, %v974
      %v993 = vsel %vm985, %v984, %v976
      %v994 = vsel %vm967, %v986, 0.0
      %v995 = vsel %vm968, %v990, 0.0
      %v996 = vsel %vm967, %v987, 0.0
      %v997 = vsel %vm968, %v991, 0.0
      %v998 = vsel %vm967, %v988, 0.0
      %v999 = vsel %vm968, %v992, 0.0
      %v1000 = vsel %vm967, %v989, 0.0
      %v1001 = vsel %vm968, %v993, 0.0
      %1002 = vst [vmem:[#allocation3 + $0x100] sm:$0xff] %v994
      %1003 = vst [vmem:[#allocation3 + $0x108] sm:$0xff] %v995
      %1004 = vst [vmem:[#allocation3 + $0x110] sm:$0xff] %v996
      %1005 = vst [vmem:[#allocation3 + $0x118] sm:$0xff] %v997
      %1006 = vst [vmem:[#allocation3 + $0x120] sm:$0xff] %v998
      %1007 = vst [vmem:[#allocation3 + $0x128] sm:$0xff] %v999
      %1008 = vst [vmem:[#allocation3 + $0x130] sm:$0xff] %v1000
      %1009 = vst [vmem:[#allocation3 + $0x138] sm:$0xff] %v1001
      %s1010 = scalar_lea.vmem %s3, 64
      %v1011 = vld [vmem:[%s1010] sm:$0xff]
      %v1012 = vld [vmem:[%s1010 + $0x8] sm:$0xff]
      %v1013 = vld [vmem:[%s1010 + $0x10] sm:$0xff]
      %v1014 = vld [vmem:[%s1010 + $0x18] sm:$0xff]
      %v1015 = vld [vmem:[%s1010 + $0x20] sm:$0xff]
      %v1016 = vld [vmem:[%s1010 + $0x28] sm:$0xff]
      %v1017 = vld [vmem:[%s1010 + $0x30] sm:$0xff]
      %v1018 = vld [vmem:[%s1010 + $0x38] sm:$0xff]
      %v1019 = vld [vmem:[#allocation3] sm:$0xff]
      %v1020 = vld [vmem:[#allocation3 + $0x8] sm:$0xff]
      %v1021 = vld [vmem:[#allocation3 + $0x10] sm:$0xff]
      %v1022 = vld [vmem:[#allocation3 + $0x18] sm:$0xff]
      %v1023 = vld [vmem:[#allocation3 + $0x20] sm:$0xff]
      %v1024 = vld [vmem:[#allocation3 + $0x28] sm:$0xff]
      %v1025 = vld [vmem:[#allocation3 + $0x30] sm:$0xff]
      %v1026 = vld [vmem:[#allocation3 + $0x38] sm:$0xff]
      %v1027 = vld [vmem:[#allocation3 + $0x40] sm:$0xff]
      %v1028 = vld [vmem:[#allocation3 + $0x48] sm:$0xff]
      %v1029 = vld [vmem:[#allocation3 + $0x50] sm:$0xff]
      %v1030 = vld [vmem:[#allocation3 + $0x58] sm:$0xff]
      %v1031 = vld [vmem:[#allocation3 + $0x60] sm:$0xff]
      %v1032 = vld [vmem:[#allocation3 + $0x68] sm:$0xff]
      %v1033 = vld [vmem:[#allocation3 + $0x70] sm:$0xff]
      %v1034 = vld [vmem:[#allocation3 + $0x78] sm:$0xff]
      %v1035 = vld [vmem:[#allocation3 + $0x80] sm:$0xff]
      %v1036 = vld [vmem:[#allocation3 + $0x88] sm:$0xff]
      %v1037 = vld [vmem:[#allocation3 + $0x90] sm:$0xff]
      %v1038 = vld [vmem:[#allocation3 + $0x98] sm:$0xff]
      %v1039 = vld [vmem:[#allocation3 + $0xa0] sm:$0xff]
      %v1040 = vld [vmem:[#allocation3 + $0xa8] sm:$0xff]
      %v1041 = vld [vmem:[#allocation3 + $0xb0] sm:$0xff]
      %v1042 = vld [vmem:[#allocation3 + $0xb8] sm:$0xff]
      %v1043 = vld [vmem:[#allocation3 + $0xc0] sm:$0xff]
      %v1044 = vld [vmem:[#allocation3 + $0xc8] sm:$0xff]
      %v1045 = vld [vmem:[#allocation3 + $0xd0] sm:$0xff]
      %v1046 = vld [vmem:[#allocation3 + $0xd8] sm:$0xff]
      %v1047 = vld [vmem:[#allocation3 + $0xe0] sm:$0xff]
      %v1048 = vld [vmem:[#allocation3 + $0xe8] sm:$0xff]
      %v1049 = vld [vmem:[#allocation3 + $0xf0] sm:$0xff]
      %v1050 = vld [vmem:[#allocation3 + $0xf8] sm:$0xff]
      %v1051 = vld [vmem:[#allocation3 + $0x100] sm:$0xff]
      %v1052 = vld [vmem:[#allocation3 + $0x108] sm:$0xff]
      %v1053 = vld [vmem:[#allocation3 + $0x110] sm:$0xff]
      %v1054 = vld [vmem:[#allocation3 + $0x118] sm:$0xff]
      %v1055 = vld [vmem:[#allocation3 + $0x120] sm:$0xff]
      %v1056 = vld [vmem:[#allocation3 + $0x128] sm:$0xff]
      %v1057 = vld [vmem:[#allocation3 + $0x130] sm:$0xff]
      %v1058 = vld [vmem:[#allocation3 + $0x138] sm:$0xff]
      %s1059 = scalar_lea.vmem %s4, 32
      %v1060 = vld [vmem:[%s1059] sm:$0xff]
      %v1061 = vld [vmem:[%s1059 + $0x8] sm:$0xff]
      %v1062 = vld [vmem:[%s1059 + $0x10] sm:$0xff]
      %v1063 = vld [vmem:[%s1059 + $0x18] sm:$0xff]
      %1065 = vset.pattern.permute.xlu0 0
      %1066 = vperm.xlu0 %1065, %v1060
      %v1067 = vpop.permute.xlu0 %1066
      %1070 = vset.pattern.permute.xlu0 0
      %1071 = vperm.xlu0 %1070, %v1061
      %v1072 = vpop.permute.xlu0 %1071
      %1075 = vset.pattern.permute.xlu0 0
      %1076 = vperm.xlu0 %1075, %v1062
      %v1077 = vpop.permute.xlu0 %1076
      %1080 = vset.pattern.permute.xlu0 0
      %1081 = vperm.xlu0 %1080, %v1063
      %v1082 = vpop.permute.xlu0 %1081
      %v1085 = vsel %vm696, %v1012, 0
      %v1088 = vsel %vm696, %v1014, 0
      %v1091 = vsel %vm696, %v1016, 0
      %v1094 = vsel %vm696, %v1018, 0
      %1096 = vmatprep.subr.mxu0 %v1020
      %1097 = vmatpush1.msra.mxu0 %v1019
      %1098 = vmatprep.subr.mxu0 %v1022
      %1099 = vmatpush1.msra.mxu0 %v1021
      %1100 = vmatprep.subr.mxu0 %v1024
      %1101 = vmatpush1.msra.mxu0 %v1023
      %1102 = vmatprep.subr.mxu0 %v1026
      %1103 = vmatpush1.msra.mxu0 %v1025
      %1104 = vmatprep.subr.mxu0 %v1028
      %1105 = vmatpush1.msra.mxu0 %v1027
      %1106 = vmatprep.subr.mxu0 %v1030
      %1107 = vmatpush1.msra.mxu0 %v1029
      %1108 = vmatprep.subr.mxu0 %v1032
      %1109 = vmatpush1.msra.mxu0 %v1031
      %1110 = vmatprep.subr.mxu0 %v1034
      %1111 = vmatpush1.msra.mxu0 %v1033
      %1112 = vmatprep.subr.mxu0 %v1036
      %1113 = vmatpush1.msra.mxu0 %v1035
      %1114 = vmatprep.subr.mxu0 %v1038
      %1115 = vmatpush1.msra.mxu0 %v1037
      %1116 = vmatprep.subr.mxu0 %v1040
      %1117 = vmatpush1.msra.mxu0 %v1039
      %1118 = vmatprep.subr.mxu0 %v1042
      %1119 = vmatpush1.msra.mxu0 %v1041
      %1120 = vmatprep.subr.mxu0 %v1044
      %1121 = vmatpush1.msra.mxu0 %v1043
      %1122 = vmatprep.subr.mxu0 %v1046
      %1123 = vmatpush1.msra.mxu0 %v1045
      %1124 = vmatprep.subr.mxu0 %v1048
      %1125 = vmatpush1.msra.mxu0 %v1047
      %1126 = vmatprep.subr.mxu0 %v1050
      %1127 = vmatpush1.msra.mxu0 %v1049
      %1128 = vmatprep.subr.mxu0 %v1052
      %1129 = vmatpush1.msra.mxu0 %v1051
      %1130 = vmatprep.subr.mxu0 %v1054
      %1131 = vmatpush1.msra.mxu0 %v1053
      %1132 = vmatprep.subr.mxu0 %v1056
      %1133 = vmatpush1.msra.mxu0 %v1055
      %1134 = vmatprep.subr.mxu0 %v1058
      %1135 = vmatpush1.msra.mxu0 %v1057
      %1136 = vmatprep.subr.mxu0 0.0
      %1137 = vmatpush1.msra.mxu0 0.0
      %1138 = vmatprep.subr.mxu0 0.0
      %1139 = vmatpush1.msra.mxu0 0.0
      %1140 = vmatprep.subr.mxu0 0.0
      %1141 = vmatpush1.msra.mxu0 0.0
      %1142 = vmatprep.subr.mxu0 0.0
      %1143 = vmatpush1.msra.mxu0 0.0
      %1144 = vmatprep.subr.mxu0 0.0
      %1145 = vmatpush1.msra.mxu0 0.0
      %1146 = vmatprep.subr.mxu0 0.0
      %1147 = vmatpush1.msra.mxu0 0.0
      %1148 = vmatprep.subr.mxu0 0.0
      %1149 = vmatpush1.msra.mxu0 0.0
      %1150 = vmatprep.subr.mxu0 0.0
      %1151 = vmatpush1.msra.mxu0 0.0
      %1152 = vmatprep.subr.mxu0 0.0
      %1153 = vmatpush1.msra.mxu0 0.0
      %1154 = vmatprep.subr.mxu0 0.0
      %1155 = vmatpush1.msra.mxu0 0.0
      %1156 = vmatprep.subr.mxu0 0.0
      %1157 = vmatpush1.msra.mxu0 0.0
      %1158 = vmatprep.subr.mxu0 0.0
      %1159 = vmatpush1.msra.mxu0 0.0
      %1160 = vmatprep.mubr.f32.mxu0 %v1085
      %1161 = vmatmul.mubr.f32.gmra.mrb[0].mxu0 %v1011
      %v1162 = vpop.f32.mrb[0].mxu0
      %v1163 = vadd.f32 %v1067, %v1162
      %v1164 = vpop.f32.mrb[0].mxu0
      %v1165 = vadd.f32 %v1067, %v1164
      %1166 = vmatprep.mubr.f32.mxu0 %v1088
      %1167 = vmatmul.mubr.f32.gmra.mrb[0].mxu0 %v1013
      %v1168 = vpop.f32.mrb[0].mxu0
      %v1169 = vadd.f32 %v1072, %v1168
      %v1170 = vpop.f32.mrb[0].mxu0
      %v1171 = vadd.f32 %v1072, %v1170
      %1172 = vmatprep.mubr.f32.mxu0 %v1091
      %1173 = vmatmul.mubr.f32.gmra.mrb[0].mxu0 %v1015
      %v1174 = vpop.f32.mrb[0].mxu0
      %v1175 = vadd.f32 %v1077, %v1174
      %v1176 = vpop.f32.mrb[0].mxu0
      %v1177 = vadd.f32 %v1077, %v1176
      %1178 = vmatprep.mubr.f32.mxu0 %v1094
      %1179 = vmatmul.mubr.f32.gmra.mrb[0].mxu0 %v1017
      %v1180 = vpop.f32.mrb[0].mxu0
      %v1181 = vadd.f32 %v1082, %v1180
      %v1182 = vpop.f32.mrb[0].mxu0
      %v1183 = vadd.f32 %v1082, %v1182
      %1184 = vdwg.mxu0
      %v1185 = vmax.f32 %v1163, 0.0
      %v1186 = vmax.f32 %v1165, 0.0
      %v1187 = vmax.f32 %v1169, 0.0
      %v1188 = vmax.f32 %v1171, 0.0
      %v1189 = vmax.f32 %v1175, 0.0
      %v1190 = vmax.f32 %v1177, 0.0
      %v1191 = vmax.f32 %v1181, 0.0
      %v1192 = vmax.f32 %v1183, 0.0
      %v1193 = vadd.f32 %v1185, %v822
      %v1194 = vadd.f32 %v1186, %v823
      %v1195 = vadd.f32 %v1187, %v824
      %v1196 = vadd.f32 %v1188, %v825
      %v1197 = vadd.f32 %v1189, %v826
      %v1198 = vadd.f32 %v1190, %v827
      %v1199 = vadd.f32 %v1191, %v828
      %v1200 = vadd.f32 %v1192, %v829
      %1201 = vst [vmem:[#allocation2] sm:$0xff] %v1193
      %1202 = vst [vmem:[#allocation2 + $0x8] sm:$0xff] %v1194
      %1203 = vst [vmem:[#allocation2 + $0x10] sm:$0xff] %v1195
      %1204 = vst [vmem:[#allocation2 + $0x18] sm:$0xff] %v1196
      %1205 = vst [vmem:[#allocation2 + $0x20] sm:$0xff] %v1197
      %1206 = vst [vmem:[#allocation2 + $0x28] sm:$0xff] %v1198
      %1207 = vst [vmem:[#allocation2 + $0x30] sm:$0xff] %v1199
      %1208 = vst [vmem:[#allocation2 + $0x38] sm:$0xff] %v1200
      %v1209 = vld [vmem:[#allocation2] sm:$0xff]
      %v1210 = vld [vmem:[#allocation2 + $0x8] sm:$0xff]
      %v1211 = vld [vmem:[#allocation2 + $0x10] sm:$0xff]
      %v1212 = vld [vmem:[#allocation2 + $0x18] sm:$0xff]
      %v1213 = vld [vmem:[#allocation2 + $0x20] sm:$0xff]
      %v1214 = vld [vmem:[#allocation2 + $0x28] sm:$0xff]
      %v1215 = vld [vmem:[#allocation2 + $0x30] sm:$0xff]
      %v1216 = vld [vmem:[#allocation2 + $0x38] sm:$0xff]
      %1217 = vst [vmem:[#allocation3] sm:$0xff] %v1209
      %1218 = vst [vmem:[#allocation3 + $0x8] sm:$0xff] %v1210
      %1219 = vst [vmem:[#allocation3 + $0x10] sm:$0xff] %v1211
      %1220 = vst [vmem:[#allocation3 + $0x18] sm:$0xff] %v1212
      %1221 = vst [vmem:[#allocation3 + $0x20] sm:$0xff] %v1213
      %1222 = vst [vmem:[#allocation3 + $0x28] sm:$0xff] %v1214
      %1223 = vst [vmem:[#allocation3 + $0x30] sm:$0xff] %v1215
      %1224 = vst [vmem:[#allocation3 + $0x38] sm:$0xff] %v1216
      %1225 = vrot.lane.b32.xlu0 %v1209, 2
      %v1226 = vpop.permute.xlu0 %1225
      %1227 = vrot.lane.b32.xlu0 %v1211, 2
      %v1228 = vpop.permute.xlu0 %1227
      %1229 = vrot.lane.b32.xlu0 %v1213, 2
      %v1230 = vpop.permute.xlu0 %1229
      %1231 = vrot.lane.b32.xlu0 %v1215, 2
      %v1232 = vpop.permute.xlu0 %1231
      %1233 = vrot.lane.b32.xlu0 %v1210, 2
      %v1234 = vpop.permute.xlu0 %1233
      %1235 = vrot.lane.b32.xlu0 %v1212, 2
      %v1236 = vpop.permute.xlu0 %1235
      %1237 = vrot.lane.b32.xlu0 %v1214, 2
      %v1238 = vpop.permute.xlu0 %1237
      %1239 = vrot.lane.b32.xlu0 %v1216, 2
      %v1240 = vpop.permute.xlu0 %1239
      %v1241 = vsel %vm942, %v1226, %v1234
      %v1242 = vsel %vm942, %v1228, %v1236
      %v1243 = vsel %vm942, %v1230, %v1238
      %v1244 = vsel %vm942, %v1232, %v1240
      %v1245 = vsel %vm942, %v1234, %v1226
      %v1246 = vsel %vm942, %v1236, %v1228
      %v1247 = vsel %vm942, %v1238, %v1230
      %v1248 = vsel %vm942, %v1240, %v1232
      %v1249 = vsel %vm924, %v1245, 0.0
      %v1250 = vsel %vm925, %v1241, 0.0
      %v1251 = vsel %vm924, %v1246, 0.0
      %v1252 = vsel %vm925, %v1242, 0.0
      %v1253 = vsel %vm924, %v1247, 0.0
      %v1254 = vsel %vm925, %v1243, 0.0
      %v1255 = vsel %vm924, %v1248, 0.0
      %v1256 = vsel %vm925, %v1244, 0.0
      %1257 = vst [vmem:[#allocation3 + $0x40] sm:$0xff] %v1249
      %1258 = vst [vmem:[#allocation3 + $0x48] sm:$0xff] %v1250
      %1259 = vst [vmem:[#allocation3 + $0x50] sm:$0xff] %v1251
      %1260 = vst [vmem:[#allocation3 + $0x58] sm:$0xff] %v1252
      %1261 = vst [vmem:[#allocation3 + $0x60] sm:$0xff] %v1253
      %1262 = vst [vmem:[#allocation3 + $0x68] sm:$0xff] %v1254
      %1263 = vst [vmem:[#allocation3 + $0x70] sm:$0xff] %v1255
      %1264 = vst [vmem:[#allocation3 + $0x78] sm:$0xff] %v1256
      %1265 = vrot.lane.b32.xlu0 %v1209, 126
      %v1266 = vpop.permute.xlu0 %1265
      %1267 = vrot.lane.b32.xlu0 %v1211, 126
      %v1268 = vpop.permute.xlu0 %1267
      %1269 = vrot.lane.b32.xlu0 %v1213, 126
      %v1270 = vpop.permute.xlu0 %1269
      %1271 = vrot.lane.b32.xlu0 %v1215, 126
      %v1272 = vpop.permute.xlu0 %1271
      %1273 = vrot.lane.b32.xlu0 %v1210, 126
      %v1274 = vpop.permute.xlu0 %1273
      %1275 = vrot.lane.b32.xlu0 %v1212, 126
      %v1276 = vpop.permute.xlu0 %1275
      %1277 = vrot.lane.b32.xlu0 %v1214, 126
      %v1278 = vpop.permute.xlu0 %1277
      %1279 = vrot.lane.b32.xlu0 %v1216, 126
      %v1280 = vpop.permute.xlu0 %1279
      %v1281 = vsel %vm985, %v1266, %v1274
      %v1282 = vsel %vm985, %v1268, %v1276
      %v1283 = vsel %vm985, %v1270, %v1278
      %v1284 = vsel %vm985, %v1272, %v1280
      %v1285 = vsel %vm985, %v1274, %v1266
      %v1286 = vsel %vm985, %v1276, %v1268
      %v1287 = vsel %vm985, %v1278, %v1270
      %v1288 = vsel %vm985, %v1280, %v1272
      %v1289 = vsel %vm967, %v1281, 0.0
      %v1290 = vsel %vm968, %v1285, 0.0
      %v1291 = vsel %vm967, %v1282, 0.0
      %v1292 = vsel %vm968, %v1286, 0.0
      %v1293 = vsel %vm967, %v1283, 0.0
      %v1294 = vsel %vm968, %v1287, 0.0
      %v1295 = vsel %vm967, %v1284, 0.0
      %v1296 = vsel %vm968, %v1288, 0.0
      %1297 = vst [vmem:[#allocation3 + $0x80] sm:$0xff] %v1289
      %1298 = vst [vmem:[#allocation3 + $0x88] sm:$0xff] %v1290
      %1299 = vst [vmem:[#allocation3 + $0x90] sm:$0xff] %v1291
      %1300 = vst [vmem:[#allocation3 + $0x98] sm:$0xff] %v1292
      %1301 = vst [vmem:[#allocation3 + $0xa0] sm:$0xff] %v1293
      %1302 = vst [vmem:[#allocation3 + $0xa8] sm:$0xff] %v1294
      %1303 = vst [vmem:[#allocation3 + $0xb0] sm:$0xff] %v1295
      %1304 = vst [vmem:[#allocation3 + $0xb8] sm:$0xff] %v1296
      %1305 = vrot.lane.b32.xlu0 %v1209, 4
      %v1306 = vpop.permute.xlu0 %1305
      %1307 = vrot.lane.b32.xlu0 %v1211, 4
      %v1308 = vpop.permute.xlu0 %1307
      %1309 = vrot.lane.b32.xlu0 %v1213, 4
      %v1310 = vpop.permute.xlu0 %1309
      %1311 = vrot.lane.b32.xlu0 %v1215, 4
      %v1312 = vpop.permute.xlu0 %1311
      %1313 = vrot.lane.b32.xlu0 %v1210, 4
      %v1314 = vpop.permute.xlu0 %1313
      %1315 = vrot.lane.b32.xlu0 %v1212, 4
      %v1316 = vpop.permute.xlu0 %1315
      %1317 = vrot.lane.b32.xlu0 %v1214, 4
      %v1318 = vpop.permute.xlu0 %1317
      %1319 = vrot.lane.b32.xlu0 %v1216, 4
      %v1320 = vpop.permute.xlu0 %1319
      %v1321 = vsel %vm856, %v1306, %v1314
      %v1322 = vsel %vm856, %v1308, %v1316
      %v1323 = vsel %vm856, %v1310, %v1318
      %v1324 = vsel %vm856, %v1312, %v1320
      %v1325 = vsel %vm856, %v1314, %v1306
      %v1326 = vsel %vm856, %v1316, %v1308
      %v1327 = vsel %vm856, %v1318, %v1310
      %v1328 = vsel %vm856, %v1320, %v1312
      %v1329 = vsel %vm838, %v1325, 0.0
      %v1330 = vsel %vm839, %v1321, 0.0
      %v1331 = vsel %vm838, %v1326, 0.0
      %v1332 = vsel %vm839, %v1322, 0.0
      %v1333 = vsel %vm838, %v1327, 0.0
      %v1334 = vsel %vm839, %v1323, 0.0
      %v1335 = vsel %vm838, %v1328, 0.0
      %v1336 = vsel %vm839, %v1324, 0.0
      %1337 = vst [vmem:[#allocation3 + $0xc0] sm:$0xff] %v1329
      %1338 = vst [vmem:[#allocation3 + $0xc8] sm:$0xff] %v1330
      %1339 = vst [vmem:[#allocation3 + $0xd0] sm:$0xff] %v1331
      %1340 = vst [vmem:[#allocation3 + $0xd8] sm:$0xff] %v1332
      %1341 = vst [vmem:[#allocation3 + $0xe0] sm:$0xff] %v1333
      %1342 = vst [vmem:[#allocation3 + $0xe8] sm:$0xff] %v1334
      %1343 = vst [vmem:[#allocation3 + $0xf0] sm:$0xff] %v1335
      %1344 = vst [vmem:[#allocation3 + $0xf8] sm:$0xff] %v1336
      %1345 = vrot.lane.b32.xlu0 %v1209, 124
      %v1346 = vpop.permute.xlu0 %1345
      %1347 = vrot.lane.b32.xlu0 %v1211, 124
      %v1348 = vpop.permute.xlu0 %1347
      %1349 = vrot.lane.b32.xlu0 %v1213, 124
      %v1350 = vpop.permute.xlu0 %1349
      %1351 = vrot.lane.b32.xlu0 %v1215, 124
      %v1352 = vpop.permute.xlu0 %1351
      %1353 = vrot.lane.b32.xlu0 %v1210, 124
      %v1354 = vpop.permute.xlu0 %1353
      %1355 = vrot.lane.b32.xlu0 %v1212, 124
      %v1356 = vpop.permute.xlu0 %1355
      %1357 = vrot.lane.b32.xlu0 %v1214, 124
      %v1358 = vpop.permute.xlu0 %1357
      %1359 = vrot.lane.b32.xlu0 %v1216, 124
      %v1360 = vpop.permute.xlu0 %1359
      %v1361 = vsel %vm899, %v1346, %v1354
      %v1362 = vsel %vm899, %v1348, %v1356
      %v1363 = vsel %vm899, %v1350, %v1358
      %v1364 = vsel %vm899, %v1352, %v1360
      %v1365 = vsel %vm899, %v1354, %v1346
      %v1366 = vsel %vm899, %v1356, %v1348
      %v1367 = vsel %vm899, %v1358, %v1350
      %v1368 = vsel %vm899, %v1360, %v1352
      %v1369 = vsel %vm881, %v1361, 0.0
      %v1370 = vsel %vm882, %v1365, 0.0
      %v1371 = vsel %vm881, %v1362, 0.0
      %v1372 = vsel %vm882, %v1366, 0.0
      %v1373 = vsel %vm881, %v1363, 0.0
      %v1374 = vsel %vm882, %v1367, 0.0
      %v1375 = vsel %vm881, %v1364, 0.0
      %v1376 = vsel %vm882, %v1368, 0.0
      %1377 = vst [vmem:[#allocation3 + $0x100] sm:$0xff] %v1369
      %1378 = vst [vmem:[#allocation3 + $0x108] sm:$0xff] %v1370
      %1379 = vst [vmem:[#allocation3 + $0x110] sm:$0xff] %v1371
      %1380 = vst [vmem:[#allocation3 + $0x118] sm:$0xff] %v1372
      %1381 = vst [vmem:[#allocation3 + $0x120] sm:$0xff] %v1373
      %1382 = vst [vmem:[#allocation3 + $0x128] sm:$0xff] %v1374
      %1383 = vst [vmem:[#allocation3 + $0x130] sm:$0xff] %v1375
      %1384 = vst [vmem:[#allocation3 + $0x138] sm:$0xff] %v1376
      %s1385 = scalar_lea.vmem %s3, 128
      %v1386 = vld [vmem:[%s1385] sm:$0xff]
      %v1387 = vld [vmem:[%s1385 + $0x8] sm:$0xff]
      %v1388 = vld [vmem:[%s1385 + $0x10] sm:$0xff]
      %v1389 = vld [vmem:[%s1385 + $0x18] sm:$0xff]
      %v1390 = vld [vmem:[%s1385 + $0x20] sm:$0xff]
      %v1391 = vld [vmem:[%s1385 + $0x28] sm:$0xff]
      %v1392 = vld [vmem:[%s1385 + $0x30] sm:$0xff]
      %v1393 = vld [vmem:[%s1385 + $0x38] sm:$0xff]
      %v1394 = vld [vmem:[#allocation3] sm:$0xff]
      %v1395 = vld [vmem:[#allocation3 + $0x8] sm:$0xff]
      %v1396 = vld [vmem:[#allocation3 + $0x10] sm:$0xff]
      %v1397 = vld [vmem:[#allocation3 + $0x18] sm:$0xff]
      %v1398 = vld [vmem:[#allocation3 + $0x20] sm:$0xff]
      %v1399 = vld [vmem:[#allocation3 + $0x28] sm:$0xff]
      %v1400 = vld [vmem:[#allocation3 + $0x30] sm:$0xff]
      %v1401 = vld [vmem:[#allocation3 + $0x38] sm:$0xff]
      %v1402 = vld [vmem:[#allocation3 + $0x40] sm:$0xff]
      %v1403 = vld [vmem:[#allocation3 + $0x48] sm:$0xff]
      %v1404 = vld [vmem:[#allocation3 + $0x50] sm:$0xff]
      %v1405 = vld [vmem:[#allocation3 + $0x58] sm:$0xff]
      %v1406 = vld [vmem:[#allocation3 + $0x60] sm:$0xff]
      %v1407 = vld [vmem:[#allocation3 + $0x68] sm:$0xff]
      %v1408 = vld [vmem:[#allocation3 + $0x70] sm:$0xff]
      %v1409 = vld [vmem:[#allocation3 + $0x78] sm:$0xff]
      %v1410 = vld [vmem:[#allocation3 + $0x80] sm:$0xff]
      %v1411 = vld [vmem:[#allocation3 + $0x88] sm:$0xff]
      %v1412 = vld [vmem:[#allocation3 + $0x90] sm:$0xff]
      %v1413 = vld [vmem:[#allocation3 + $0x98] sm:$0xff]
      %v1414 = vld [vmem:[#allocation3 + $0xa0] sm:$0xff]
      %v1415 = vld [vmem:[#allocation3 + $0xa8] sm:$0xff]
      %v1416 = vld [vmem:[#allocation3 + $0xb0] sm:$0xff]
      %v1417 = vld [vmem:[#allocation3 + $0xb8] sm:$0xff]
      %v1418 = vld [vmem:[#allocation3 + $0xc0] sm:$0xff]
      %v1419 = vld [vmem:[#allocation3 + $0xc8] sm:$0xff]
      %v1420 = vld [vmem:[#allocation3 + $0xd0] sm:$0xff]
      %v1421 = vld [vmem:[#allocation3 + $0xd8] sm:$0xff]
      %v1422 = vld [vmem:[#allocation3 + $0xe0] sm:$0xff]
      %v1423 = vld [vmem:[#allocation3 + $0xe8] sm:$0xff]
      %v1424 = vld [vmem:[#allocation3 + $0xf0] sm:$0xff]
      %v1425 = vld [vmem:[#allocation3 + $0xf8] sm:$0xff]
      %v1426 = vld [vmem:[#allocation3 + $0x100] sm:$0xff]
      %v1427 = vld [vmem:[#allocation3 + $0x108] sm:$0xff]
      %v1428 = vld [vmem:[#allocation3 + $0x110] sm:$0xff]
      %v1429 = vld [vmem:[#allocation3 + $0x118] sm:$0xff]
      %v1430 = vld [vmem:[#allocation3 + $0x120] sm:$0xff]
      %v1431 = vld [vmem:[#allocation3 + $0x128] sm:$0xff]
      %v1432 = vld [vmem:[#allocation3 + $0x130] sm:$0xff]
      %v1433 = vld [vmem:[#allocation3 + $0x138] sm:$0xff]
      %s1434 = scalar_lea.vmem %s4, 64
      %v1435 = vld [vmem:[%s1434] sm:$0xff]
      %v1436 = vld [vmem:[%s1434 + $0x8] sm:$0xff]
      %v1437 = vld [vmem:[%s1434 + $0x10] sm:$0xff]
      %v1438 = vld [vmem:[%s1434 + $0x18] sm:$0xff]
      %1440 = vset.pattern.permute.xlu0 0
      %1441 = vperm.xlu0 %1440, %v1435
      %v1442 = vpop.permute.xlu0 %1441
      %1445 = vset.pattern.permute.xlu0 0
      %1446 = vperm.xlu0 %1445, %v1436
      %v1447 = vpop.permute.xlu0 %1446
      %1450 = vset.pattern.permute.xlu0 0
      %1451 = vperm.xlu0 %1450, %v1437
      %v1452 = vpop.permute.xlu0 %1451
      %1455 = vset.pattern.permute.xlu0 0
      %1456 = vperm.xlu0 %1455, %v1438
      %v1457 = vpop.permute.xlu0 %1456
      %v1460 = vsel %vm696, %v1387, 0
      %v1463 = vsel %vm696, %v1389, 0
      %v1466 = vsel %vm696, %v1391, 0
      %v1469 = vsel %vm696, %v1393, 0
      %1471 = vmatprep.subr.mxu0 %v1395
      %1472 = vmatpush1.msra.mxu0 %v1394
      %1473 = vmatprep.subr.mxu0 %v1397
      %1474 = vmatpush1.msra.mxu0 %v1396
      %1475 = vmatprep.subr.mxu0 %v1399
      %1476 = vmatpush1.msra.mxu0 %v1398
      %1477 = vmatprep.subr.mxu0 %v1401
      %1478 = vmatpush1.msra.mxu0 %v1400
      %1479 = vmatprep.subr.mxu0 %v1403
      %1480 = vmatpush1.msra.mxu0 %v1402
      %1481 = vmatprep.subr.mxu0 %v1405
      %1482 = vmatpush1.msra.mxu0 %v1404
      %1483 = vmatprep.subr.mxu0 %v1407
      %1484 = vmatpush1.msra.mxu0 %v1406
      %1485 = vmatprep.subr.mxu0 %v1409
      %1486 = vmatpush1.msra.mxu0 %v1408
      %1487 = vmatprep.subr.mxu0 %v1411
      %1488 = vmatpush1.msra.mxu0 %v1410
      %1489 = vmatprep.subr.mxu0 %v1413
      %1490 = vmatpush1.msra.mxu0 %v1412
      %1491 = vmatprep.subr.mxu0 %v1415
      %1492 = vmatpush1.msra.mxu0 %v1414
      %1493 = vmatprep.subr.mxu0 %v1417
      %1494 = vmatpush1.msra.mxu0 %v1416
      %1495 = vmatprep.subr.mxu0 %v1419
      %1496 = vmatpush1.msra.mxu0 %v1418
      %1497 = vmatprep.subr.mxu0 %v1421
      %1498 = vmatpush1.msra.mxu0 %v1420
      %1499 = vmatprep.subr.mxu0 %v1423
      %1500 = vmatpush1.msra.mxu0 %v1422
      %1501 = vmatprep.subr.mxu0 %v1425
      %1502 = vmatpush1.msra.mxu0 %v1424
      %1503 = vmatprep.subr.mxu0 %v1427
      %1504 = vmatpush1.msra.mxu0 %v1426
      %1505 = vmatprep.subr.mxu0 %v1429
      %1506 = vmatpush1.msra.mxu0 %v1428
      %1507 = vmatprep.subr.mxu0 %v1431
      %1508 = vmatpush1.msra.mxu0 %v1430
      %1509 = vmatprep.subr.mxu0 %v1433
      %1510 = vmatpush1.msra.mxu0 %v1432
      %1511 = vmatprep.subr.mxu0 0.0
      %1512 = vmatpush1.msra.mxu0 0.0
      %1513 = vmatprep.subr.mxu0 0.0
      %1514 = vmatpush1.msra.mxu0 0.0
      %1515 = vmatprep.subr.mxu0 0.0
      %1516 = vmatpush1.msra.mxu0 0.0
      %1517 = vmatprep.subr.mxu0 0.0
      %1518 = vmatpush1.msra.mxu0 0.0
      %1519 = vmatprep.subr.mxu0 0.0
      %1520 = vmatpush1.msra.mxu0 0.0
      %1521 = vmatprep.subr.mxu0 0.0
      %1522 = vmatpush1.msra.mxu0 0.0
      %1523 = vmatprep.subr.mxu0 0.0
      %1524 = vmatpush1.msra.mxu0 0.0
      %1525 = vmatprep.subr.mxu0 0.0
      %1526 = vmatpush1.msra.mxu0 0.0
      %1527 = vmatprep.subr.mxu0 0.0
      %1528 = vmatpush1.msra.mxu0 0.0
      %1529 = vmatprep.subr.mxu0 0.0
      %1530 = vmatpush1.msra.mxu0 0.0
      %1531 = vmatprep.subr.mxu0 0.0
      %1532 = vmatpush1.msra.mxu0 0.0
      %1533 = vmatprep.subr.mxu0 0.0
      %1534 = vmatpush1.msra.mxu0 0.0
      %1535 = vmatprep.mubr.f32.mxu0 %v1460
      %1536 = vmatmul.mubr.f32.gmra.mrb[0].mxu0 %v1386
      %v1537 = vpop.f32.mrb[0].mxu0
      %v1538 = vadd.f32 %v1442, %v1537
      %v1539 = vpop.f32.mrb[0].mxu0
      %v1540 = vadd.f32 %v1442, %v1539
      %1541 = vmatprep.mubr.f32.mxu0 %v1463
      %1542 = vmatmul.mubr.f32.gmra.mrb[0].mxu0 %v1388
      %v1543 = vpop.f32.mrb[0].mxu0
      %v1544 = vadd.f32 %v1447, %v1543
      %v1545 = vpop.f32.mrb[0].mxu0
      %v1546 = vadd.f32 %v1447, %v1545
      %1547 = vmatprep.mubr.f32.mxu0 %v1466
      %1548 = vmatmul.mubr.f32.gmra.mrb[0].mxu0 %v1390
      %v1549 = vpop.f32.mrb[0].mxu0
      %v1550 = vadd.f32 %v1452, %v1549
      %v1551 = vpop.f32.mrb[0].mxu0
      %v1552 = vadd.f32 %v1452, %v1551
      %1553 = vmatprep.mubr.f32.mxu0 %v1469
      %1554 = vmatmul.mubr.f32.gmra.mrb[0].mxu0 %v1392
      %v1555 = vpop.f32.mrb[0].mxu0
      %v1556 = vadd.f32 %v1457, %v1555
      %v1557 = vpop.f32.mrb[0].mxu0
      %v1558 = vadd.f32 %v1457, %v1557
      %1559 = vdwg.mxu0
      %v1560 = vmax.f32 %v1538, 0.0
      %v1561 = vmax.f32 %v1540, 0.0
      %v1562 = vmax.f32 %v1544, 0.0
      %v1563 = vmax.f32 %v1546, 0.0
      %v1564 = vmax.f32 %v1550, 0.0
      %v1565 = vmax.f32 %v1552, 0.0
      %v1566 = vmax.f32 %v1556, 0.0
      %v1567 = vmax.f32 %v1558, 0.0
      %v1568 = vadd.f32 %v1560, %v1209
      %v1569 = vadd.f32 %v1561, %v1210
      %v1570 = vadd.f32 %v1562, %v1211
      %v1571 = vadd.f32 %v1563, %v1212
      %v1572 = vadd.f32 %v1564, %v1213
      %v1573 = vadd.f32 %v1565, %v1214
      %v1574 = vadd.f32 %v1566, %v1215
      %v1575 = vadd.f32 %v1567, %v1216
      %1576 = vst [vmem:[#allocation2] sm:$0xff] %v1568
      %1577 = vst [vmem:[#allocation2 + $0x8] sm:$0xff] %v1569
      %1578 = vst [vmem:[#allocation2 + $0x10] sm:$0xff] %v1570
      %1579 = vst [vmem:[#allocation2 + $0x18] sm:$0xff] %v1571
      %1580 = vst [vmem:[#allocation2 + $0x20] sm:$0xff] %v1572
      %1581 = vst [vmem:[#allocation2 + $0x28] sm:$0xff] %v1573
      %1582 = vst [vmem:[#allocation2 + $0x30] sm:$0xff] %v1574
      %1583 = vst [vmem:[#allocation2 + $0x38] sm:$0xff] %v1575
      %v1584 = vld [vmem:[#allocation2] sm:$0xff]
      %v1585 = vld [vmem:[#allocation2 + $0x8] sm:$0xff]
      %v1586 = vld [vmem:[#allocation2 + $0x10] sm:$0xff]
      %v1587 = vld [vmem:[#allocation2 + $0x18] sm:$0xff]
      %v1588 = vld [vmem:[#allocation2 + $0x20] sm:$0xff]
      %v1589 = vld [vmem:[#allocation2 + $0x28] sm:$0xff]
      %v1590 = vld [vmem:[#allocation2 + $0x30] sm:$0xff]
      %v1591 = vld [vmem:[#allocation2 + $0x38] sm:$0xff]
      %1592 = vst [vmem:[#allocation3] sm:$0xff] %v1584
      %1593 = vst [vmem:[#allocation3 + $0x8] sm:$0xff] %v1585
      %1594 = vst [vmem:[#allocation3 + $0x10] sm:$0xff] %v1586
      %1595 = vst [vmem:[#allocation3 + $0x18] sm:$0xff] %v1587
      %1596 = vst [vmem:[#allocation3 + $0x20] sm:$0xff] %v1588
      %1597 = vst [vmem:[#allocation3 + $0x28] sm:$0xff] %v1589
      %1598 = vst [vmem:[#allocation3 + $0x30] sm:$0xff] %v1590
      %1599 = vst [vmem:[#allocation3 + $0x38] sm:$0xff] %v1591
      %1600 = vrot.lane.b32.xlu0 %v1584, 1
      %v1601 = vpop.permute.xlu0 %1600
      %1602 = vrot.lane.b32.xlu0 %v1586, 1
      %v1603 = vpop.permute.xlu0 %1602
      %1604 = vrot.lane.b32.xlu0 %v1588, 1
      %v1605 = vpop.permute.xlu0 %1604
      %1606 = vrot.lane.b32.xlu0 %v1590, 1
      %v1607 = vpop.permute.xlu0 %1606
      %1608 = vrot.lane.b32.xlu0 %v1585, 1
      %v1609 = vpop.permute.xlu0 %1608
      %1610 = vrot.lane.b32.xlu0 %v1587, 1
      %v1611 = vpop.permute.xlu0 %1610
      %1612 = vrot.lane.b32.xlu0 %v1589, 1
      %v1613 = vpop.permute.xlu0 %1612
      %1614 = vrot.lane.b32.xlu0 %v1591, 1
      %v1615 = vpop.permute.xlu0 %1614
      %v1616 = vsel %vm556, %v1601, %v1609
      %v1617 = vsel %vm556, %v1603, %v1611
      %v1618 = vsel %vm556, %v1605, %v1613
      %v1619 = vsel %vm556, %v1607, %v1615
      %v1620 = vsel %vm556, %v1609, %v1601
      %v1621 = vsel %vm556, %v1611, %v1603
      %v1622 = vsel %vm556, %v1613, %v1605
      %v1623 = vsel %vm556, %v1615, %v1607
      %v1624 = vsel %vm538, %v1620, 0.0
      %v1625 = vsel %vm539, %v1616, 0.0
      %v1626 = vsel %vm538, %v1621, 0.0
      %v1627 = vsel %vm539, %v1617, 0.0
      %v1628 = vsel %vm538, %v1622, 0.0
      %v1629 = vsel %vm539, %v1618, 0.0
      %v1630 = vsel %vm538, %v1623, 0.0
      %v1631 = vsel %vm539, %v1619, 0.0
      %1632 = vst [vmem:[#allocation3 + $0x40] sm:$0xff] %v1624
      %1633 = vst [vmem:[#allocation3 + $0x48] sm:$0xff] %v1625
      %1634 = vst [vmem:[#allocation3 + $0x50] sm:$0xff] %v1626
      %1635 = vst [vmem:[#allocation3 + $0x58] sm:$0xff] %v1627
      %1636 = vst [vmem:[#allocation3 + $0x60] sm:$0xff] %v1628
      %1637 = vst [vmem:[#allocation3 + $0x68] sm:$0xff] %v1629
      %1638 = vst [vmem:[#allocation3 + $0x70] sm:$0xff] %v1630
      %1639 = vst [vmem:[#allocation3 + $0x78] sm:$0xff] %v1631
      %1640 = vrot.lane.b32.xlu0 %v1584, 127
      %v1641 = vpop.permute.xlu0 %1640
      %1642 = vrot.lane.b32.xlu0 %v1586, 127
      %v1643 = vpop.permute.xlu0 %1642
      %1644 = vrot.lane.b32.xlu0 %v1588, 127
      %v1645 = vpop.permute.xlu0 %1644
      %1646 = vrot.lane.b32.xlu0 %v1590, 127
      %v1647 = vpop.permute.xlu0 %1646
      %1648 = vrot.lane.b32.xlu0 %v1585, 127
      %v1649 = vpop.permute.xlu0 %1648
      %1650 = vrot.lane.b32.xlu0 %v1587, 127
      %v1651 = vpop.permute.xlu0 %1650
      %1652 = vrot.lane.b32.xlu0 %v1589, 127
      %v1653 = vpop.permute.xlu0 %1652
      %1654 = vrot.lane.b32.xlu0 %v1591, 127
      %v1655 = vpop.permute.xlu0 %1654
      %v1656 = vsel %vm599, %v1641, %v1649
      %v1657 = vsel %vm599, %v1643, %v1651
      %v1658 = vsel %vm599, %v1645, %v1653
      %v1659 = vsel %vm599, %v1647, %v1655
      %v1660 = vsel %vm599, %v1649, %v1641
      %v1661 = vsel %vm599, %v1651, %v1643
      %v1662 = vsel %vm599, %v1653, %v1645
      %v1663 = vsel %vm599, %v1655, %v1647
      %v1664 = vsel %vm581, %v1656, 0.0
      %v1665 = vsel %vm582, %v1660, 0.0
      %v1666 = vsel %vm581, %v1657, 0.0
      %v1667 = vsel %vm582, %v1661, 0.0
      %v1668 = vsel %vm581, %v1658, 0.0
      %v1669 = vsel %vm582, %v1662, 0.0
      %v1670 = vsel %vm581, %v1659, 0.0
      %v1671 = vsel %vm582, %v1663, 0.0
      %1672 = vst [vmem:[#allocation3 + $0x80] sm:$0xff] %v1664
      %1673 = vst [vmem:[#allocation3 + $0x88] sm:$0xff] %v1665
      %1674 = vst [vmem:[#allocation3 + $0x90] sm:$0xff] %v1666
      %1675 = vst [vmem:[#allocation3 + $0x98] sm:$0xff] %v1667
      %1676 = vst [vmem:[#allocation3 + $0xa0] sm:$0xff] %v1668
      %1677 = vst [vmem:[#allocation3 + $0xa8] sm:$0xff] %v1669
      %1678 = vst [vmem:[#allocation3 + $0xb0] sm:$0xff] %v1670
      %1679 = vst [vmem:[#allocation3 + $0xb8] sm:$0xff] %v1671
      %1680 = vrot.lane.b32.xlu0 %v1584, 8
      %v1681 = vpop.permute.xlu0 %1680
      %1682 = vrot.lane.b32.xlu0 %v1586, 8
      %v1683 = vpop.permute.xlu0 %1682
      %1684 = vrot.lane.b32.xlu0 %v1588, 8
      %v1685 = vpop.permute.xlu0 %1684
      %1686 = vrot.lane.b32.xlu0 %v1590, 8
      %v1687 = vpop.permute.xlu0 %1686
      %1688 = vrot.lane.b32.xlu0 %v1585, 8
      %v1689 = vpop.permute.xlu0 %1688
      %1690 = vrot.lane.b32.xlu0 %v1587, 8
      %v1691 = vpop.permute.xlu0 %1690
      %1692 = vrot.lane.b32.xlu0 %v1589, 8
      %v1693 = vpop.permute.xlu0 %1692
      %1694 = vrot.lane.b32.xlu0 %v1591, 8
      %v1695 = vpop.permute.xlu0 %1694
      %v1696 = vsel %vm470, %v1681, %v1689
      %v1697 = vsel %vm470, %v1683, %v1691
      %v1698 = vsel %vm470, %v1685, %v1693
      %v1699 = vsel %vm470, %v1687, %v1695
      %v1700 = vsel %vm470, %v1689, %v1681
      %v1701 = vsel %vm470, %v1691, %v1683
      %v1702 = vsel %vm470, %v1693, %v1685
      %v1703 = vsel %vm470, %v1695, %v1687
      %v1704 = vsel %vm452, %v1700, 0.0
      %v1705 = vsel %vm453, %v1696, 0.0
      %v1706 = vsel %vm452, %v1701, 0.0
      %v1707 = vsel %vm453, %v1697, 0.0
      %v1708 = vsel %vm452, %v1702, 0.0
      %v1709 = vsel %vm453, %v1698, 0.0
      %v1710 = vsel %vm452, %v1703, 0.0
      %v1711 = vsel %vm453, %v1699, 0.0
      %1712 = vst [vmem:[#allocation3 + $0xc0] sm:$0xff] %v1704
      %1713 = vst [vmem:[#allocation3 + $0xc8] sm:$0xff] %v1705
      %1714 = vst [vmem:[#allocation3 + $0xd0] sm:$0xff] %v1706
      %1715 = vst [vmem:[#allocation3 + $0xd8] sm:$0xff] %v1707
      %1716 = vst [vmem:[#allocation3 + $0xe0] sm:$0xff] %v1708
      %1717 = vst [vmem:[#allocation3 + $0xe8] sm:$0xff] %v1709
      %1718 = vst [vmem:[#allocation3 + $0xf0] sm:$0xff] %v1710
      %1719 = vst [vmem:[#allocation3 + $0xf8] sm:$0xff] %v1711
      %1720 = vrot.lane.b32.xlu0 %v1584, 120
      %v1721 = vpop.permute.xlu0 %1720
      %1722 = vrot.lane.b32.xlu0 %v1586, 120
      %v1723 = vpop.permute.xlu0 %1722
      %1724 = vrot.lane.b32.xlu0 %v1588, 120
      %v1725 = vpop.permute.xlu0 %1724
      %1726 = vrot.lane.b32.xlu0 %v1590, 120
      %v1727 = vpop.permute.xlu0 %1726
      %1728 = vrot.lane.b32.xlu0 %v1585, 120
      %v1729 = vpop.permute.xlu0 %1728
      %1730 = vrot.lane.b32.xlu0 %v1587, 120
      %v1731 = vpop.permute.xlu0 %1730
      %1732 = vrot.lane.b32.xlu0 %v1589, 120
      %v1733 = vpop.permute.xlu0 %1732
      %1734 = vrot.lane.b32.xlu0 %v1591, 120
      %v1735 = vpop.permute.xlu0 %1734
      %v1736 = vsel %vm513, %v1721, %v1729
      %v1737 = vsel %vm513, %v1723, %v1731
      %v1738 = vsel %vm513, %v1725, %v1733
      %v1739 = vsel %vm513, %v1727, %v1735
      %v1740 = vsel %vm513, %v1729, %v1721
      %v1741 = vsel %vm513, %v1731, %v1723
      %v1742 = vsel %vm513, %v1733, %v1725
      %v1743 = vsel %vm513, %v1735, %v1727
      %v1744 = vsel %vm495, %v1736, 0.0
      %v1745 = vsel %vm496, %v1740, 0.0
      %v1746 = vsel %vm495, %v1737, 0.0
      %v1747 = vsel %vm496, %v1741, 0.0
      %v1748 = vsel %vm495, %v1738, 0.0
      %v1749 = vsel %vm496, %v1742, 0.0
      %v1750 = vsel %vm495, %v1739, 0.0
      %v1751 = vsel %vm496, %v1743, 0.0
      %1752 = vst [vmem:[#allocation3 + $0x100] sm:$0xff] %v1744
      %1753 = vst [vmem:[#allocation3 + $0x108] sm:$0xff] %v1745
      %1754 = vst [vmem:[#allocation3 + $0x110] sm:$0xff] %v1746
      %1755 = vst [vmem:[#allocation3 + $0x118] sm:$0xff] %v1747
      %1756 = vst [vmem:[#allocation3 + $0x120] sm:$0xff] %v1748
      %1757 = vst [vmem:[#allocation3 + $0x128] sm:$0xff] %v1749
      %1758 = vst [vmem:[#allocation3 + $0x130] sm:$0xff] %v1750
      %1759 = vst [vmem:[#allocation3 + $0x138] sm:$0xff] %v1751
      %s1760 = scalar_lea.vmem %s3, 192
      %v1761 = vld [vmem:[%s1760] sm:$0xff]
      %v1762 = vld [vmem:[%s1760 + $0x8] sm:$0xff]
      %v1763 = vld [vmem:[%s1760 + $0x10] sm:$0xff]
      %v1764 = vld [vmem:[%s1760 + $0x18] sm:$0xff]
      %v1765 = vld [vmem:[%s1760 + $0x20] sm:$0xff]
      %v1766 = vld [vmem:[%s1760 + $0x28] sm:$0xff]
      %v1767 = vld [vmem:[%s1760 + $0x30] sm:$0xff]
      %v1768 = vld [vmem:[%s1760 + $0x38] sm:$0xff]
      %v1769 = vld [vmem:[#allocation3] sm:$0xff]
      %v1770 = vld [vmem:[#allocation3 + $0x8] sm:$0xff]
      %v1771 = vld [vmem:[#allocation3 + $0x10] sm:$0xff]
      %v1772 = vld [vmem:[#allocation3 + $0x18] sm:$0xff]
      %v1773 = vld [vmem:[#allocation3 + $0x20] sm:$0xff]
      %v1774 = vld [vmem:[#allocation3 + $0x28] sm:$0xff]
      %v1775 = vld [vmem:[#allocation3 + $0x30] sm:$0xff]
      %v1776 = vld [vmem:[#allocation3 + $0x38] sm:$0xff]
      %v1777 = vld [vmem:[#allocation3 + $0x40] sm:$0xff]
      %v1778 = vld [vmem:[#allocation3 + $0x48] sm:$0xff]
      %v1779 = vld [vmem:[#allocation3 + $0x50] sm:$0xff]
      %v1780 = vld [vmem:[#allocation3 + $0x58] sm:$0xff]
      %v1781 = vld [vmem:[#allocation3 + $0x60] sm:$0xff]
      %v1782 = vld [vmem:[#allocation3 + $0x68] sm:$0xff]
      %v1783 = vld [vmem:[#allocation3 + $0x70] sm:$0xff]
      %v1784 = vld [vmem:[#allocation3 + $0x78] sm:$0xff]
      %v1785 = vld [vmem:[#allocation3 + $0x80] sm:$0xff]
      %v1786 = vld [vmem:[#allocation3 + $0x88] sm:$0xff]
      %v1787 = vld [vmem:[#allocation3 + $0x90] sm:$0xff]
      %v1788 = vld [vmem:[#allocation3 + $0x98] sm:$0xff]
      %v1789 = vld [vmem:[#allocation3 + $0xa0] sm:$0xff]
      %v1790 = vld [vmem:[#allocation3 + $0xa8] sm:$0xff]
      %v1791 = vld [vmem:[#allocation3 + $0xb0] sm:$0xff]
      %v1792 = vld [vmem:[#allocation3 + $0xb8] sm:$0xff]
      %v1793 = vld [vmem:[#allocation3 + $0xc0] sm:$0xff]
      %v1794 = vld [vmem:[#allocation3 + $0xc8] sm:$0xff]
      %v1795 = vld [vmem:[#allocation3 + $0xd0] sm:$0xff]
      %v1796 = vld [vmem:[#allocation3 + $0xd8] sm:$0xff]
      %v1797 = vld [vmem:[#allocation3 + $0xe0] sm:$0xff]
      %v1798 = vld [vmem:[#allocation3 + $0xe8] sm:$0xff]
      %v1799 = vld [vmem:[#allocation3 + $0xf0] sm:$0xff]
      %v1800 = vld [vmem:[#allocation3 + $0xf8] sm:$0xff]
      %v1801 = vld [vmem:[#allocation3 + $0x100] sm:$0xff]
      %v1802 = vld [vmem:[#allocation3 + $0x108] sm:$0xff]
      %v1803 = vld [vmem:[#allocation3 + $0x110] sm:$0xff]
      %v1804 = vld [vmem:[#allocation3 + $0x118] sm:$0xff]
      %v1805 = vld [vmem:[#allocation3 + $0x120] sm:$0xff]
      %v1806 = vld [vmem:[#allocation3 + $0x128] sm:$0xff]
      %v1807 = vld [vmem:[#allocation3 + $0x130] sm:$0xff]
      %v1808 = vld [vmem:[#allocation3 + $0x138] sm:$0xff]
      %s1809 = scalar_lea.vmem %s4, 96
      %v1810 = vld [vmem:[%s1809] sm:$0xff]
      %v1811 = vld [vmem:[%s1809 + $0x8] sm:$0xff]
      %v1812 = vld [vmem:[%s1809 + $0x10] sm:$0xff]
      %v1813 = vld [vmem:[%s1809 + $0x18] sm:$0xff]
      %1815 = vset.pattern.permute.xlu0 0
      %1816 = vperm.xlu0 %1815, %v1810
      %v1817 = vpop.permute.xlu0 %1816
      %1820 = vset.pattern.permute.xlu0 0
      %1821 = vperm.xlu0 %1820, %v1811
      %v1822 = vpop.permute.xlu0 %1821
      %1825 = vset.pattern.permute.xlu0 0
      %1826 = vperm.xlu0 %1825, %v1812
      %v1827 = vpop.permute.xlu0 %1826
      %1830 = vset.pattern.permute.xlu0 0
      %1831 = vperm.xlu0 %1830, %v1813
      %v1832 = vpop.permute.xlu0 %1831
      %v1835 = vsel %vm696, %v1762, 0
      %v1838 = vsel %vm696, %v1764, 0
      %v1841 = vsel %vm696, %v1766, 0
      %v1844 = vsel %vm696, %v1768, 0
      %1846 = vmatprep.subr.mxu0 %v1770
      %1847 = vmatpush1.msra.mxu0 %v1769
      %1848 = vmatprep.subr.mxu0 %v1772
      %1849 = vmatpush1.msra.mxu0 %v1771
      %1850 = vmatprep.subr.mxu0 %v1774
      %1851 = vmatpush1.msra.mxu0 %v1773
      %1852 = vmatprep.subr.mxu0 %v1776
      %1853 = vmatpush1.msra.mxu0 %v1775
      %1854 = vmatprep.subr.mxu0 %v1778
      %1855 = vmatpush1.msra.mxu0 %v1777
      %1856 = vmatprep.subr.mxu0 %v1780
      %1857 = vmatpush1.msra.mxu0 %v1779
      %1858 = vmatprep.subr.mxu0 %v1782
      %1859 = vmatpush1.msra.mxu0 %v1781
      %1860 = vmatprep.subr.mxu0 %v1784
      %1861 = vmatpush1.msra.mxu0 %v1783
      %1862 = vmatprep.subr.mxu0 %v1786
      %1863 = vmatpush1.msra.mxu0 %v1785
      %1864 = vmatprep.subr.mxu0 %v1788
      %1865 = vmatpush1.msra.mxu0 %v1787
      %1866 = vmatprep.subr.mxu0 %v1790
      %1867 = vmatpush1.msra.mxu0 %v1789
      %1868 = vmatprep.subr.mxu0 %v1792
      %1869 = vmatpush1.msra.mxu0 %v1791
      %1870 = vmatprep.subr.mxu0 %v1794
      %1871 = vmatpush1.msra.mxu0 %v1793
      %1872 = vmatprep.subr.mxu0 %v1796
      %1873 = vmatpush1.msra.mxu0 %v1795
      %1874 = vmatprep.subr.mxu0 %v1798
      %1875 = vmatpush1.msra.mxu0 %v1797
      %1876 = vmatprep.subr.mxu0 %v1800
      %1877 = vmatpush1.msra.mxu0 %v1799
      %1878 = vmatprep.subr.mxu0 %v1802
      %1879 = vmatpush1.msra.mxu0 %v1801
      %1880 = vmatprep.subr.mxu0 %v1804
      %1881 = vmatpush1.msra.mxu0 %v1803
      %1882 = vmatprep.subr.mxu0 %v1806
      %1883 = vmatpush1.msra.mxu0 %v1805
      %1884 = vmatprep.subr.mxu0 %v1808
      %1885 = vmatpush1.msra.mxu0 %v1807
      %1886 = vmatprep.subr.mxu0 0.0
      %1887 = vmatpush1.msra.mxu0 0.0
      %1888 = vmatprep.subr.mxu0 0.0
      %1889 = vmatpush1.msra.mxu0 0.0
      %1890 = vmatprep.subr.mxu0 0.0
      %1891 = vmatpush1.msra.mxu0 0.0
      %1892 = vmatprep.subr.mxu0 0.0
      %1893 = vmatpush1.msra.mxu0 0.0
      %1894 = vmatprep.subr.mxu0 0.0
      %1895 = vmatpush1.msra.mxu0 0.0
      %1896 = vmatprep.subr.mxu0 0.0
      %1897 = vmatpush1.msra.mxu0 0.0
      %1898 = vmatprep.subr.mxu0 0.0
      %1899 = vmatpush1.msra.mxu0 0.0
      %1900 = vmatprep.subr.mxu0 0.0
      %1901 = vmatpush1.msra.mxu0 0.0
      %1902 = vmatprep.subr.mxu0 0.0
      %1903 = vmatpush1.msra.mxu0 0.0
      %1904 = vmatprep.subr.mxu0 0.0
      %1905 = vmatpush1.msra.mxu0 0.0
      %1906 = vmatprep.subr.mxu0 0.0
      %1907 = vmatpush1.msra.mxu0 0.0
      %1908 = vmatprep.subr.mxu0 0.0
      %1909 = vmatpush1.msra.mxu0 0.0
      %1910 = vmatprep.mubr.f32.mxu0 %v1835
      %1911 = vmatmul.mubr.f32.gmra.mrb[0].mxu0 %v1761
      %v1912 = vpop.f32.mrb[0].mxu0
      %v1913 = vadd.f32 %v1817, %v1912
      %v1914 = vpop.f32.mrb[0].mxu0
      %v1915 = vadd.f32 %v1817, %v1914
      %1916 = vmatprep.mubr.f32.mxu0 %v1838
      %1917 = vmatmul.mubr.f32.gmra.mrb[0].mxu0 %v1763
      %v1918 = vpop.f32.mrb[0].mxu0
      %v1919 = vadd.f32 %v1822, %v1918
      %v1920 = vpop.f32.mrb[0].mxu0
      %v1921 = vadd.f32 %v1822, %v1920
      %1922 = vmatprep.mubr.f32.mxu0 %v1841
      %1923 = vmatmul.mubr.f32.gmra.mrb[0].mxu0 %v1765
      %v1924 = vpop.f32.mrb[0].mxu0
      %v1925 = vadd.f32 %v1827, %v1924
      %v1926 = vpop.f32.mrb[0].mxu0
      %v1927 = vadd.f32 %v1827, %v1926
      %1928 = vmatprep.mubr.f32.mxu0 %v1844
      %1929 = vmatmul.mubr.f32.gmra.mrb[0].mxu0 %v1767
      %v1930 = vpop.f32.mrb[0].mxu0
      %v1931 = vadd.f32 %v1832, %v1930
      %v1932 = vpop.f32.mrb[0].mxu0
      %v1933 = vadd.f32 %v1832, %v1932
      %1934 = vdwg.mxu0
      %v1935 = vmax.f32 %v1913, 0.0
      %v1936 = vmax.f32 %v1915, 0.0
      %v1937 = vmax.f32 %v1919, 0.0
      %v1938 = vmax.f32 %v1921, 0.0
      %v1939 = vmax.f32 %v1925, 0.0
      %v1940 = vmax.f32 %v1927, 0.0
      %v1941 = vmax.f32 %v1931, 0.0
      %v1942 = vmax.f32 %v1933, 0.0
      %v1943 = vadd.f32 %v1935, %v1584
      %v1944 = vadd.f32 %v1936, %v1585
      %v1945 = vadd.f32 %v1937, %v1586
      %v1946 = vadd.f32 %v1938, %v1587
      %v1947 = vadd.f32 %v1939, %v1588
      %v1948 = vadd.f32 %v1940, %v1589
      %v1949 = vadd.f32 %v1941, %v1590
      %v1950 = vadd.f32 %v1942, %v1591
      %1951 = vst [vmem:[#allocation2] sm:$0xff] %v1943
      %1952 = vst [vmem:[#allocation2 + $0x8] sm:$0xff] %v1944
      %1953 = vst [vmem:[#allocation2 + $0x10] sm:$0xff] %v1945
      %1954 = vst [vmem:[#allocation2 + $0x18] sm:$0xff] %v1946
      %1955 = vst [vmem:[#allocation2 + $0x20] sm:$0xff] %v1947
      %1956 = vst [vmem:[#allocation2 + $0x28] sm:$0xff] %v1948
      %1957 = vst [vmem:[#allocation2 + $0x30] sm:$0xff] %v1949
      %1958 = vst [vmem:[#allocation2 + $0x38] sm:$0xff] %v1950
      %v1959 = vld [vmem:[%s5] sm:$0xff]
      %v1960 = vld [vmem:[%s5 + $0x8] sm:$0xff]
      %v1961 = vld [vmem:[#allocation2] sm:$0xff]
      %v1962 = vld [vmem:[#allocation2 + $0x8] sm:$0xff]
      %v1963 = vld [vmem:[#allocation2 + $0x10] sm:$0xff]
      %v1964 = vld [vmem:[#allocation2 + $0x18] sm:$0xff]
      %v1965 = vld [vmem:[#allocation2 + $0x20] sm:$0xff]
      %v1966 = vld [vmem:[#allocation2 + $0x28] sm:$0xff]
      %v1967 = vld [vmem:[#allocation2 + $0x30] sm:$0xff]
      %v1968 = vld [vmem:[#allocation2 + $0x38] sm:$0xff]
      %v1969 = vld [vmem:[%s6] sm:$0xff]
      %v1970 = vld [vmem:[%s6 + $0x8] sm:$0xff]
      %1972 = vset.pattern.permute.xlu0 0
      %1973 = vperm.xlu0 %1972, %v1969
      %v1974 = vpop.permute.xlu0 %1973
      %1977 = vset.pattern.permute.xlu0 0
      %1978 = vperm.xlu0 %1977, %v1970
      %v1979 = vpop.permute.xlu0 %1978
      %v1982 = vsel %vm696, %v1959, 0
      %v1985 = vsel %vm696, %v1960, 0
      %1987 = vmatprep.subr.mxu0 %v1962
      %1988 = vmatpush1.msra.mxu0 %v1961
      %1989 = vmatprep.subr.mxu0 %v1964
      %1990 = vmatpush1.msra.mxu0 %v1963
      %1991 = vmatprep.subr.mxu0 %v1966
      %1992 = vmatpush1.msra.mxu0 %v1965
      %1993 = vmatprep.subr.mxu0 %v1968
      %1994 = vmatpush1.msra.mxu0 %v1967
      %1995 = vmatprep.subr.mxu0 0.0
      %1996 = vmatpush1.msra.mxu0 0.0
      %1997 = vmatprep.subr.mxu0 0.0
      %1998 = vmatpush1.msra.mxu0 0.0
      %1999 = vmatprep.subr.mxu0 0.0
      %2000 = vmatpush1.msra.mxu0 0.0
      %2001 = vmatprep.subr.mxu0 0.0
      %2002 = vmatpush1.msra.mxu0 0.0
      %2003 = vmatprep.subr.mxu0 0.0
      %2004 = vmatpush1.msra.mxu0 0.0
      %2005 = vmatprep.subr.mxu0 0.0
      %2006 = vmatpush1.msra.mxu0 0.0
      %2007 = vmatprep.subr.mxu0 0.0
      %2008 = vmatpush1.msra.mxu0 0.0
      %2009 = vmatprep.subr.mxu0 0.0
      %2010 = vmatpush1.msra.mxu0 0.0
      %2011 = vmatprep.subr.mxu0 0.0
      %2012 = vmatpush1.msra.mxu0 0.0
      %2013 = vmatprep.subr.mxu0 0.0
      %2014 = vmatpush1.msra.mxu0 0.0
      %2015 = vmatprep.subr.mxu0 0.0
      %2016 = vmatpush1.msra.mxu0 0.0
      %2017 = vmatprep.subr.mxu0 0.0
      %2018 = vmatpush1.msra.mxu0 0.0
      %2019 = vmatprep.subr.mxu0 0.0
      %2020 = vmatpush1.msra.mxu0 0.0
      %2021 = vmatprep.subr.mxu0 0.0
      %2022 = vmatpush1.msra.mxu0 0.0
      %2023 = vmatprep.subr.mxu0 0.0
      %2024 = vmatpush1.msra.mxu0 0.0
      %2025 = vmatprep.subr.mxu0 0.0
      %2026 = vmatpush1.msra.mxu0 0.0
      %2027 = vmatprep.subr.mxu0 0.0
      %2028 = vmatpush1.msra.mxu0 0.0
      %2029 = vmatprep.subr.mxu0 0.0
      %2030 = vmatpush1.msra.mxu0 0.0
      %2031 = vmatprep.subr.mxu0 0.0
      %2032 = vmatpush1.msra.mxu0 0.0
      %2033 = vmatprep.subr.mxu0 0.0
      %2034 = vmatpush1.msra.mxu0 0.0
      %2035 = vmatprep.subr.mxu0 0.0
      %2036 = vmatpush1.msra.mxu0 0.0
      %2037 = vmatprep.subr.mxu0 0.0
      %2038 = vmatpush1.msra.mxu0 0.0
      %2039 = vmatprep.subr.mxu0 0.0
      %2040 = vmatpush1.msra.mxu0 0.0
      %2041 = vmatprep.subr.mxu0 0.0
      %2042 = vmatpush1.msra.mxu0 0.0
      %2043 = vmatprep.subr.mxu0 0.0
      %2044 = vmatpush1.msra.mxu0 0.0
      %2045 = vmatprep.subr.mxu0 0.0
      %2046 = vmatpush1.msra.mxu0 0.0
      %2047 = vmatprep.subr.mxu0 0.0
      %2048 = vmatpush1.msra.mxu0 0.0
      %2049 = vmatprep.subr.mxu0 0.0
      %2050 = vmatpush1.msra.mxu0 0.0
      %2051 = vmatprep.mubr.f32.mxu0 0.0
      %2052 = vmatmul.mubr.f32.gmra.mrb[0].mxu0 %v1982
      %v2053 = vpop.f32.mrb[0].mxu0
      %v2054 = vadd.f32 %v1974, %v2053
      %v2055 = vpop.f32.mrb[0].mxu0
      %v2056 = vadd.f32 %v1974, %v2055
      %2057 = vmatprep.mubr.f32.mxu0 0.0
      %2058 = vmatmul.mubr.f32.gmra.mrb[0].mxu0 %v1985
      %v2059 = vpop.f32.mrb[0].mxu0
      %v2060 = vadd.f32 %v1979, %v2059
      %v2061 = vpop.f32.mrb[0].mxu0
      %v2062 = vadd.f32 %v1979, %v2061
      %2063 = vdwg.mxu0
      %2064 = vst [vmem:[%s278] sm:$0xff] %v2054
      %2065 = vst [vmem:[%s278 + $0x8] sm:$0xff] %v2056
      %2066 = vst [vmem:[%s278 + $0x10] sm:$0xff] %v2060
      %2067 = vst [vmem:[%s278 + $0x18] sm:$0xff] %v2062
      %p2068 = scmp.lt.s32.totalorder %s18, 1
      %s2069 = scalar_select %p2068, %s18, 1
      %s2070 = smul.addr %s2069, 4
      %s2071 = smul.addr %s2070, 8
      %s2072 = scalar_lea.vmem %s7, %s2071
      // Predicated region
      $region49: #{prediction_generation_forward.1} parent=47 // pred_check
        %p2073 = pneg %p188
      $region50: #{prediction_generation_forward.1} parent=47 // pred_check_branch
        %2075 = sbr.rel (%p2073) target = $region52
      $region51: #{prediction_generation_forward.1} parent=47 // pred_region
        _
      $region52: #{prediction_generation_forward.1} parent=47 // pred_fallthru
        _
    $region48: #{prediction_generation_forward.1} parent=5 // pred_fallthru
      _
    %p2076 = scmp.le.s32.totalorder 2, %s13
    // Predicated region
    $region53: #{prediction_generation_forward.1} parent=5 // pred_check
      %p2077 = pneg %p2076
    $region54: #{prediction_generation_forward.1} parent=5 // pred_check_branch
      %2079 = sbr.rel (%p2077) target = $region56
    $region55: #{prediction_generation_forward.1} parent=5 // pred_region
      %s2080 = ssub.s32 %s13, 2
      // Predicated region
      $region57: #{prediction_generation_forward.1} parent=55 // pred_check
        %p2081 = pneg %p194
      $region58: #{prediction_generation_forward.1} parent=55 // pred_check_branch
        %2083 = sbr.rel (%p2081) target = $region60
      $region59: #{prediction_generation_forward.1} parent=55 // pred_region
        %p2084 = scmp.lt.s32.totalorder %s19, 1
        %s2085 = scalar_select %p2084, %s19, 1
        %s2086 = smul.addr %s2085, 4
        %s2087 = smul.addr %s2086, 8
        %s2088 = scalar_lea.vmem %s7, %s2087
      $region60: #{prediction_generation_forward.1} parent=55 // pred_fallthru
        _
    $region56: #{prediction_generation_forward.1} parent=5 // pred_fallthru
      _
  $region6: #{prediction_generation_forward.1} parent=0 // loop_footer
    %s17 = sadd.s32 1, %s13
  $region7: #{prediction_generation_forward.1} parent=0 // loop_footer_branch
    %12 = sbr.rel target = $region3
  $region8: #{prediction_generation_forward.1} parent=0 // loop_exit
    _

</llo_original>
